<compile_context>
chip_gen: v6e
topology: v6e:2x2x1
jax: 0.10.0
libtpu: 0.0.40
codegen_flags: <defaults>
</compile_context>

<pallas_src>
import math
import functools

import numpy as np
import jax
import jax.numpy as jnp
from jax import lax
from jax.experimental import pallas as pl
from jax.experimental.pallas import tpu as pltpu


# ---------------------------------------------------------------------------
# Pallas kernel: tiled conv-as-matmul with fused bias / gain / leaky / residual
# ---------------------------------------------------------------------------

def _mm_kernel(gain, activate, has_bias, has_res, *refs):
    """o = leaky(gain * (A @ W + b)) + res, accumulated over the K grid axis."""
    a_ref, w_ref = refs[0], refs[1]
    idx = 2
    b_ref = None
    r_ref = None
    if has_bias:
        b_ref = refs[idx]
        idx += 1
    if has_res:
        r_ref = refs[idx]
        idx += 1
    o_ref = refs[idx]
    acc_ref = refs[idx + 1]

    k = pl.program_id(1)

    @pl.when(k == 0)
    def _():
        acc_ref[...] = jnp.zeros_like(acc_ref)

    acc_ref[...] += jnp.dot(a_ref[...], w_ref[...],
                            preferred_element_type=jnp.float32)

    @pl.when(k == pl.num_programs(1) - 1)
    def _():
        y = acc_ref[...]
        if has_bias:
            y = y + b_ref[...]                # (1, O_pad) broadcast over rows
        if gain != 1.0:
            y = y * gain
        if activate:
            y = jnp.where(y > 0, y, 0.2 * y)  # leaky_relu(0.2)
        if has_res:
            y = y + r_ref[...]
        o_ref[...] = y.astype(o_ref.dtype)


# ---------------------------------------------------------------------------
# Pallas wrapper (tiling / padding policy)
# ---------------------------------------------------------------------------

# Conservative per-kernel VMEM working-set budget: fits v7x's 64 MiB (32 MiB default
# scoped); v5e/v6e (128 MiB) could take ~2x larger row tiles.
_VMEM_TILE_BUDGET = 16 * 1024 * 1024
_MAX_TILE_M = 1024
_MAX_TILE_K = 512            # 128-aligned K slices keep the MXU fed without padding waste


def _round_up(x, m):
    return ((x + m - 1) // m) * m


def _pad_cols(x, cols):
    if x.shape[-1] == cols:
        return x
    return jnp.pad(x, ((0, 0), (0, cols - x.shape[-1])))


def _pick_tile_m(M, tk, o_pad, has_res):
    # Per-row VMEM bytes: double-buffered bf16 A tile + f32 out (x2 buffers)
    # + f32 accumulator (+ double-buffered f32 residual).
    per_row = 4 * tk + (2 + 1 + (2 if has_res else 0)) * 4 * o_pad
    tm = _VMEM_TILE_BUDGET // max(per_row, 1)
    tm = min(tm, _MAX_TILE_M, _round_up(M, 8))
    return max(8, (tm // 8) * 8)


def conv_matmul(a, w_mat, bias=None, res=None, gain=1.0, activate=False):
    """(M, K) @ (K, O) with fused bias/gain/leaky/residual.  Returns (M, O_pad) f32."""
    M, K = a.shape
    O = w_mat.shape[1]
    O_pad = _round_up(O, 128)                 # lane-dense (unmasked) output stores

    # K tiling: pad K with zeros so every K slice is full-size / 128-aligned.
    if K <= _MAX_TILE_K:
        tk, Kp = K, K
    else:
        tk = _MAX_TILE_K
        Kp = _round_up(K, tk)
    nk = Kp // tk

    a_bf = a.astype(jnp.bfloat16)             # bf16 MXU inputs, f32 accumulate
    if Kp != K:
        a_bf = jnp.pad(a_bf, ((0, 0), (0, Kp - K)))
    w_p = _pad_cols(w_mat.astype(jnp.float32), O_pad)
    if Kp != K:
        w_p = jnp.pad(w_p, ((0, Kp - K), (0, 0)))
    w_bf = w_p.astype(jnp.bfloat16)

    tm = _pick_tile_m(M, tk, O_pad, res is not None)
    gm = pl.cdiv(M, tm)

    args = [a_bf, w_bf]
    in_specs = [
        pl.BlockSpec((tm, tk), lambda i, k: (i, k)),
        pl.BlockSpec((tk, O_pad), lambda i, k: (k, 0)),
    ]
    if bias is not None:
        args.append(_pad_cols(bias.reshape(1, O).astype(jnp.float32), O_pad))
        in_specs.append(pl.BlockSpec((1, O_pad), lambda i, k: (0, 0)))
    if res is not None:
        args.append(_pad_cols(res.astype(jnp.float32), O_pad))
        in_specs.append(pl.BlockSpec((tm, O_pad), lambda i, k: (i, 0)))

    kernel = functools.partial(_mm_kernel, float(gain), bool(activate),
                               bias is not None, res is not None)
    return pl.pallas_call(
        kernel,
        out_shape=jax.ShapeDtypeStruct((M, O_pad), jnp.float32),
        grid_spec=pltpu.PrefetchScalarGridSpec(
            num_scalar_prefetch=0,
            grid=(gm, nk),
            in_specs=in_specs,
            out_specs=pl.BlockSpec((tm, O_pad), lambda i, k: (i, 0)),
            scratch_shapes=[pltpu.VMEM((tm, O_pad), jnp.float32)],
        ),
        compiler_params=pltpu.CompilerParams(
            dimension_semantics=("parallel", "arbitrary"),
            vmem_limit_bytes=48 * 1024 * 1024,
        ),
    )(*args)


# ---------------------------------------------------------------------------
# Glue (reshapes / padding / im2col / weight packing & filter folding) — plain JAX
# ---------------------------------------------------------------------------

def bilinear_filter_np():
    h = np.array([1.0, 3.0, 3.0, 1.0], np.float32)
    k = h[:, None] * h[None, :]
    return k / k.sum()


def _nchw_to_rows(x_nchw):
    N, C, H, W = x_nchw.shape
    return jnp.transpose(x_nchw, (0, 2, 3, 1)).reshape(N * H * W, C)


def _rows_to_nchw(rows, N, H, W, C):
    return jnp.transpose(rows.reshape(N, H, W, C), (0, 3, 1, 2))


def _im2col(x_nhwc, kh, kw, out_h, out_w, stride):
    # TODO(synk): patch extraction stays as XLA glue; forming the kh*kw shifted views
    # from a VMEM-resident spatial tile inside the kernel would remove this HBM
    # intermediate (the largest remaining HBM-traffic lever).
    N, _, _, C = x_nhwc.shape
    cols = []
    for a in range(kh):
        for b in range(kw):
            sl = x_nhwc[:, a:a + stride * (out_h - 1) + 1:stride,
                        b:b + stride * (out_w - 1) + 1:stride, :]
            cols.append(sl)
    return jnp.concatenate(cols, axis=-1).reshape(N * out_h * out_w, kh * kw * C)


def _w_to_mat(w):
    # PyTorch (O, C, kh, kw)  ->  (kh*kw*C, O), matching im2col (a,b)-outer / c-inner.
    O, C, kh, kw = w.shape
    return jnp.transpose(w, (2, 3, 1, 0)).reshape(kh * kw * C, O)


def _fold_filter_into_w(w, h):
    # Full 2-D convolution of the 4x4 bilinear filter with each (o,c) 3x3 kernel.
    # conv_transpose2d(x, h, pad=1) followed by conv2d(w1, stride=2) is exactly a single
    # 6x6 stride-2 pad-2 conv with this combined kernel (h is symmetric).
    O, C, kh, kw = w.shape
    Kh, Kw = h.shape
    out = jnp.zeros((O, C, Kh + kh - 1, Kw + kw - 1), jnp.float32)
    for a in range(kh):
        for b in range(kw):
            out = out.at[:, :, a:a + Kh, b:b + Kw].add(
                w[:, :, a, b][:, :, None, None] * h[None, None, :, :])
    return out


# ---------------------------------------------------------------------------
# DiscriminatorBlock forward (Pallas-backed)
# ---------------------------------------------------------------------------

def discriminator_block_forward(x_nchw, img_nchw, params, in_channels=0):
    h = jnp.asarray(bilinear_filter_np())
    sqrt2 = math.sqrt(2.0)

    if in_channels == 0:
        N, Ci, H, W = img_nchw.shape
        tmp_ch = params['w_rgb'].shape[0]
        a = _nchw_to_rows(img_nchw)
        w_rgb = params['w_rgb'][:, :, 0, 0].T * (1.0 / math.sqrt(Ci))
        res = _nchw_to_rows(x_nchw) if x_nchw is not None else None
        # fromrgb: 1x1 conv + bias, act_gain sqrt(2), leaky, then x = x + y (fused res)
        rows = conv_matmul(a, w_rgb, bias=params['b_rgb'], res=res,
                           gain=sqrt2, activate=True)
        x_nchw = _rows_to_nchw(rows[:, :tmp_ch], N, H, W, tmp_ch)
        img_nchw = None

    N, C, H, W = x_nchw.shape
    Ho, Wo = H // 2, W // 2
    out_ch = params['w1'].shape[0]

    x_nhwc = jnp.transpose(x_nchw, (0, 2, 3, 1))
    x_pad1 = jnp.pad(x_nhwc, ((0, 0), (1, 1), (1, 1), (0, 0))).astype(jnp.bfloat16)

    # ---- skip: bilinear-down + 1x1 conv folded into ONE 4x4 stride-2 pad-1 conv,
    #      gain sqrt(2)/2, no bias/act.  Output stays column-padded (lane-dense) so it
    #      fuses directly as conv1's residual without repacking. ----
    w_skip_eff = (params['w_skip'][:, :, 0, 0][:, :, None, None]
                  * h[None, None, :, :]) * (1.0 / math.sqrt(C))
    a_skip = _im2col(x_pad1, 4, 4, Ho, Wo, stride=2)
    y_skip_pad = conv_matmul(a_skip, _w_to_mat(w_skip_eff),
                             gain=sqrt2 / 2.0, activate=False)

    # ---- conv0: 3x3 pad-1 conv + bias, gain sqrt(2), leaky ----
    a0 = _im2col(x_pad1, 3, 3, H, W, stride=1)
    w0 = _w_to_mat(params['w0']) * (1.0 / math.sqrt(C * 9))
    rows0 = conv_matmul(a0, w0, bias=params['b0'], gain=sqrt2, activate=True)
    x0_nhwc = rows0[:, :C].reshape(N, H, W, C)

    # ---- conv1 (down): transposed bilinear filter + 3x3 stride-2 conv folded into ONE
    #      6x6 stride-2 pad-2 conv, bias, net gain sqrt(2)*sqrt(2)/2 == 1, leaky, with
    #      the skip-path output fused as a residual add (y.add_(x)). ----
    w1_eff = _fold_filter_into_w(params['w1'] * (1.0 / math.sqrt(C * 9)), h)
    x0_pad2 = jnp.pad(x0_nhwc, ((0, 0), (2, 2), (2, 2), (0, 0))).astype(jnp.bfloat16)
    a1 = _im2col(x0_pad2, 6, 6, Ho, Wo, stride=2)
    out_rows = conv_matmul(a1, _w_to_mat(w1_eff), bias=params['b1'],
                           res=y_skip_pad, gain=1.0, activate=True)
    out = _rows_to_nchw(out_rows[:, :out_ch], N, Ho, Wo, out_ch)
    return out, img_nchw


# ---------------------------------------------------------------------------
# Pure-JAX reference (mirrors the PyTorch module) for verification
# ---------------------------------------------------------------------------

def _ref_conv(x, w, stride=1, padding=0):
    return lax.conv_general_dilated(
        x, w, (stride, stride), [(padding, padding), (padding, padding)],
        dimension_numbers=('NCHW', 'OIHW', 'NCHW'),
        precision=lax.Precision.HIGHEST)


def _ref_depthwise(x, k, stride, padding):
    N, C, H, W = x.shape
    y = _ref_conv(x.reshape(N * C, 1, H, W), k[None, None], stride, padding)
    return y.reshape(N, C, y.shape[2], y.shape[3])


def _ref_equalized(x, w, b, h, activate, down, gain):
    Cin, ks = w.shape[1], w.shape[-1]
    w = w * (1.0 / math.sqrt(Cin * ks * ks))
    if down and ks == 1:
        y = _ref_conv(_ref_depthwise(x, h, 2, 1), w)
    elif down:
        # conv_transpose2d(x, h, padding=1, stride=1) == conv2d(x, flip(h) == h, padding=2)
        y = _ref_conv(_ref_depthwise(x, h, 1, 2), w, stride=2, padding=0)
    else:
        y = _ref_conv(x, w, padding=ks // 2)
    if b is not None:
        y = y + b.reshape(1, -1, 1, 1)
    ag = (math.sqrt(2.0) if activate else 1.0) * gain
    if ag != 1.0:
        y = y * ag
    if activate:
        y = jnp.where(y > 0, y, 0.2 * y)
    return y


def ref_forward(x, img, params):
    h = jnp.asarray(bilinear_filter_np())
    y = _ref_equalized(img, params['w_rgb'], params['b_rgb'], h, True, False, 1.0)
    x = x + y if x is not None else y
    ysk = _ref_equalized(x, params['w_skip'], None, h, False, True, math.sqrt(2.0) / 2)
    x = _ref_equalized(x, params['w0'], params['b0'], h, True, False, 1.0)
    x = _ref_equalized(x, params['w1'], params['b1'], h, True, True, math.sqrt(2.0) / 2)
    return ysk + x


# ---------------------------------------------------------------------------
# Main
# ---------------------------------------------------------------------------

if __name__ == "__main__":
    key = jax.random.PRNGKey(0)
    ks = jax.random.split(key, 8)

    N, H, W = 2, 16, 16
    img_ch, tmp_ch, out_ch = 3, 8, 16     # in_channels == 0 configuration

    params = {
        'w_rgb': jax.random.normal(ks[0], (tmp_ch, img_ch, 1, 1), jnp.float32),
        'b_rgb': jnp.zeros((tmp_ch,), jnp.float32),
        'w0': jax.random.normal(ks[1], (tmp_ch, tmp_ch, 3, 3), jnp.float32),
        'b0': jnp.zeros((tmp_ch,), jnp.float32),
        'w1': jax.random.normal(ks[2], (out_ch, tmp_ch, 3, 3), jnp.float32),
        'b1': jnp.zeros((out_ch,), jnp.float32),
        'w_skip': jax.random.normal(ks[3], (out_ch, tmp_ch, 1, 1), jnp.float32),
    }

    x = jax.random.normal(ks[4], (N, tmp_ch, H, W), jnp.float32)
    img = jax.random.normal(ks[5], (N, img_ch, H, W), jnp.float32)

    out, img_out = discriminator_block_forward(x, img, params, in_channels=0)
    out = jax.block_until_ready(out)

    assert out.shape == (N, out_ch, H // 2, W // 2)
    assert img_out is None

    ref = jax.block_until_ready(ref_forward(x, img, params))
    err = float(jnp.max(jnp.abs(out - ref)) / (jnp.max(jnp.abs(ref)) + 1e-6))
    # bf16 MXU inputs with f32 accumulation — tolerance sized for that.
    assert err < 2e-2, f"mismatch vs reference: rel_err={err}"

    print("KERNEL_OK")
</pallas_src>

<mosaic_0001>
module attributes {stable_mosaic.version = 11 : i64} {
  func.func @_mm_kernel(%arg0: i32, %arg1: i32, %arg2: memref<512x3xbf16, #tpu.memory_space<vmem>>, %arg3: memref<3x128xbf16, #tpu.memory_space<vmem>>, %arg4: memref<1x128xf32, #tpu.memory_space<vmem>>, %arg5: memref<512x128xf32, #tpu.memory_space<vmem>>, %arg6: memref<512x128xf32, #tpu.memory_space<vmem>>, %arg7: memref<512x128xf32, #tpu.memory_space<vmem>>) attributes {dimension_semantics = [#tpu.dimension_semantics<parallel>, #tpu.dimension_semantics<arbitrary>], iteration_bounds = array<i64: 1, 1>, scalar_prefetch = 0 : i64, scratch_operands = 1 : i64, tpu.core_type = #tpu.core_type<tc>, window_params = [{transform_indices = @transform_0, window_bounds = array<i64: 512, 3>}, {transform_indices = @transform_1, window_bounds = array<i64: 3, 128>}, {pipeline_mode = #tpu.pipeline_mode<synchronous>, transform_indices = @transform_2, window_bounds = array<i64: 1, 128>}, {transform_indices = @transform_3, window_bounds = array<i64: 512, 128>}, {transform_indices = @transform_4, window_bounds = array<i64: 512, 128>}]} {
    %c0_i32 = arith.constant 0 : i32
    %0 = arith.cmpi eq, %arg1, %c0_i32 : i32
    %1 = arith.extui %0 : i1 to i32
    %c0_i32_0 = arith.constant 0 : i32
    %2 = arith.cmpi ne, %1, %c0_i32_0 : i32
    scf.if %2 {
      %cst_10 = arith.constant 0.000000e+00 : f32
      %12 = vector.broadcast %cst_10 : f32 to vector<512x128xf32>
      %c0_11 = arith.constant 0 : index
      %c0_12 = arith.constant 0 : index
      %13 = vector.load %arg7[%c0_11, %c0_12] : memref<512x128xf32, #tpu.memory_space<vmem>>, vector<512x128xf32>
      tpu.vector_store %arg7[%c0_11, %c0_12], %12 {strides = array<i32>} : memref<512x128xf32, #tpu.memory_space<vmem>>, vector<512x128xf32>,
    } else {
    }
    %c0 = arith.constant 0 : index
    %c0_1 = arith.constant 0 : index
    %3 = vector.load %arg7[%c0, %c0_1] : memref<512x128xf32, #tpu.memory_space<vmem>>, vector<512x128xf32>
    %c0_2 = arith.constant 0 : index
    %c0_3 = arith.constant 0 : index
    %4 = vector.load %arg2[%c0_2, %c0_3] : memref<512x3xbf16, #tpu.memory_space<vmem>>, vector<512x3xbf16>
    %c0_4 = arith.constant 0 : index
    %c0_5 = arith.constant 0 : index
    %5 = vector.load %arg3[%c0_4, %c0_5] : memref<3x128xbf16, #tpu.memory_space<vmem>>, vector<3x128xbf16>
    %cst = arith.constant dense<0.000000e+00> : vector<512x128xf32>
    %6 = tpu.matmul %4, %5, %cst {dimension_numbers = #tpu.dot_dimension_numbers<[1], [0], [0], [1], [0, 0, 1, 1], [], []>} : vector<512x3xbf16>, vector<3x128xbf16>, vector<512x128xf32> -> vector<512x128xf32>
    %7 = arith.addf %3, %6 : vector<512x128xf32>
    %c0_6 = arith.constant 0 : index
    %c0_7 = arith.constant 0 : index
    %8 = vector.load %arg7[%c0_6, %c0_7] : memref<512x128xf32, #tpu.memory_space<vmem>>, vector<512x128xf32>
    tpu.vector_store %arg7[%c0_6, %c0_7], %7 {strides = array<i32>} : memref<512x128xf32, #tpu.memory_space<vmem>>, vector<512x128xf32>,
    %c0_i32_8 = arith.constant 0 : i32
    %9 = arith.cmpi eq, %arg1, %c0_i32_8 : i32
    %10 = arith.extui %9 : i1 to i32
    %c0_i32_9 = arith.constant 0 : i32
    %11 = arith.cmpi ne, %10, %c0_i32_9 : i32
    scf.if %11 {
      %c0_10 = arith.constant 0 : index
      %c0_11 = arith.constant 0 : index
      %12 = vector.load %arg7[%c0_10, %c0_11] : memref<512x128xf32, #tpu.memory_space<vmem>>, vector<512x128xf32>
      %c0_12 = arith.constant 0 : index
      %c0_13 = arith.constant 0 : index
      %13 = vector.load %arg4[%c0_12, %c0_13] : memref<1x128xf32, #tpu.memory_space<vmem>>, vector<1x128xf32>
      %14 = vector.broadcast %13 : vector<1x128xf32> to vector<512x128xf32>
      %15 = arith.addf %12, %14 : vector<512x128xf32>
      %cst_14 = arith.constant 1.41421354 : f32
      %16 = vector.broadcast %cst_14 : f32 to vector<512x128xf32>
      %17 = arith.mulf %15, %16 : vector<512x128xf32>
      %cst_15 = arith.constant 0.000000e+00 : f32
      %18 = vector.broadcast %cst_15 : f32 to vector<512x128xf32>
      %19 = arith.cmpf ogt, %17, %18 : vector<512x128xf32>
      %cst_16 = arith.constant 2.000000e-01 : f32
      %20 = vector.broadcast %cst_16 : f32 to vector<512x128xf32>
      %21 = arith.mulf %20, %17 : vector<512x128xf32>
      %22 = arith.select %19, %17, %21 : vector<512x128xi1>, vector<512x128xf32>
      %c0_17 = arith.constant 0 : index
      %c0_18 = arith.constant 0 : index
      %23 = vector.load %arg5[%c0_17, %c0_18] : memref<512x128xf32, #tpu.memory_space<vmem>>, vector<512x128xf32>
      %24 = arith.addf %22, %23 : vector<512x128xf32>
      %c0_19 = arith.constant 0 : index
      %c0_20 = arith.constant 0 : index
      %25 = vector.load %arg6[%c0_19, %c0_20] : memref<512x128xf32, #tpu.memory_space<vmem>>, vector<512x128xf32>
      tpu.vector_store %arg6[%c0_19, %c0_20], %24 {strides = array<i32>} : memref<512x128xf32, #tpu.memory_space<vmem>>, vector<512x128xf32>,
    } else {
    }
    return
  }
  func.func @transform_0(%arg0: i32, %arg1: i32) -> (i32, i32) {
    %c0_i32 = arith.constant 0 : i32
    return %arg0, %arg1 : i32, i32
  }
  func.func @transform_1(%arg0: i32, %arg1: i32) -> (i32, i32) {
    %c0_i32 = arith.constant 0 : i32
    %c0_i32_0 = arith.constant 0 : i32
    return %arg1, %c0_i32 : i32, i32
  }
  func.func @transform_2(%arg0: i32, %arg1: i32) -> (i32, i32) {
    %c0_i32 = arith.constant 0 : i32
    %c0_i32_0 = arith.constant 0 : i32
    %c0_i32_1 = arith.constant 0 : i32
    return %c0_i32, %c0_i32_0 : i32, i32
  }
  func.func @transform_3(%arg0: i32, %arg1: i32) -> (i32, i32) {
    %c0_i32 = arith.constant 0 : i32
    %c0_i32_0 = arith.constant 0 : i32
    return %arg0, %c0_i32 : i32, i32
  }
  func.func @transform_4(%arg0: i32, %arg1: i32) -> (i32, i32) {
    %c0_i32 = arith.constant 0 : i32
    %c0_i32_0 = arith.constant 0 : i32
    return %arg0, %c0_i32 : i32, i32
  }
}

</mosaic_0001>

<llo_original>
// kernel: tpu_custom_call.1
$region0: #{tpu_custom_call.1}
  #allocation0 [shape = 'u32[]', space=smem, size = 0x4, offset = 0x4, fixed_abs, tag = 'smem constant byte address 0x4 - core index']
  #allocation1 [shape = 'u32[144,128]{1,0:T(1,128)}', space=vmem, size = 0x12000, scoped, tag = 'internal scratch']
  #allocation2 [shape = 'f32[512,128]{1,0:T(8,128)}', space=vmem, size = 0x40000, scoped, tag = 'scratch operand']
  %s0 = inlined_call_operand.vmem [shape: bf16[512,3], index: 0, kind: input, shape index: {}]
  %s1 = inlined_call_operand.vmem [shape: bf16[3,128], index: 1, kind: input, shape index: {}]
  %s2 = inlined_call_operand.vmem [shape: f32[1,128], index: 2, kind: input, shape index: {}]
  %s3 = inlined_call_operand.hbm [shape: f32[512,128], index: 3, kind: input, shape index: {}]
  %s4 = inlined_call_operand.hbm [shape: f32[512,128], index: 4, kind: output, shape index: {}]
  %s5 = sld [smem:[#allocation0]]
  $region38: #{tpu_custom_call.1} parent=0
    _
  %s7 = ssub.s32 1, %s5
  %s8 = scalar_select 0, %s7, %s5
  $region1: #{tpu_custom_call.1} parent=0
    #allocation3 [shape = 'u8[262144]{0}', space=vmem, size = 0x40000, scoped, tag = 'input window, operand 3, single buffered']
    #allocation4 [shape = 's32[1]{0}', space=sflag, size = 0x4, scoped, tag = 'scoped memory for tpu_custom_call.1']
    #allocation5 [shape = 's32[1]{0}', space=sflag, size = 0x4, scoped, tag = 'scoped memory for tpu_custom_call.1']
    #allocation6 [shape = 'u8[262144]{0}', space=vmem, size = 0x40000, scoped, tag = 'output window, operand 0, single buffered']
    %9 = vsyncpa [#allocation4], 0
    %10 = vsyncpa [#allocation5], 0
    // Predicated region
    $region2: #{tpu_custom_call.1} parent=1 // pred_check
      _
    $region3: #{tpu_custom_call.1} parent=1 // pred_check_branch
      %12 = sbr.rel (0) target = $region5
    $region4: #{tpu_custom_call.1} parent=1 // pred_region
      _
    $region5: #{tpu_custom_call.1} parent=1 // pred_fallthru
      _
    // Predicated region
    $region6: #{tpu_custom_call.1} parent=1 // pred_check
      _
    $region7: #{tpu_custom_call.1} parent=1 // pred_check_branch
      %14 = sbr.rel (0) target = $region9
    $region8: #{tpu_custom_call.1} parent=1 // pred_region
      _
    $region9: #{tpu_custom_call.1} parent=1 // pred_fallthru
      _
    // Predicated region
    $region10: #{tpu_custom_call.1} parent=1 // pred_check
      _
    $region11: #{tpu_custom_call.1} parent=1 // pred_check_branch
      %16 = sbr.rel (0) target = $region13
    $region12: #{tpu_custom_call.1} parent=1 // pred_region
      _
    $region13: #{tpu_custom_call.1} parent=1 // pred_fallthru
      _
    // Predicated region
    $region14: #{tpu_custom_call.1} parent=1 // pred_check
      _
    $region15: #{tpu_custom_call.1} parent=1 // pred_check_branch
      %18 = sbr.rel (0) target = $region17
    $region16: #{tpu_custom_call.1} parent=1 // pred_region
      %s20 = ssub.s32 8192, 8192
      %21 = vsyncadd [#allocation4], %s20
      %s22 = sshll.u32 [#allocation3], 4
      %s23 = int_to_ptr.vmem [resolvable:$true] %s22
      %28 = dma.hbm_to_vmem [thread:$0]  %s3, 8192, %s23, [#allocation4], 128, 128, 8
    $region17: #{tpu_custom_call.1} parent=1 // pred_fallthru
      _
    // Predicated region
    $region18: #{tpu_custom_call.1} parent=1 // pred_check
      _
    $region19: #{tpu_custom_call.1} parent=1 // pred_check_branch
      %30 = sbr.rel (0) target = $region21
    $region20: #{tpu_custom_call.1} parent=1 // pred_region
      %31 = dma.done [#allocation4], 8192
    $region21: #{tpu_custom_call.1} parent=1 // pred_fallthru
      _
    %p33 = scmp.eq.s32.totalorder 0, 0
    // Predicated region
    $region22: #{tpu_custom_call.1} parent=1 // pred_check
      %p34 = pneg %p33
    $region23: #{tpu_custom_call.1} parent=1 // pred_check_branch
      %36 = sbr.rel (%p34) target = $region25
    $region24: #{tpu_custom_call.1} parent=1 // pred_region
      %37 = vst [vmem:[#allocation2] sm:$0xff] 0.0
      %38 = vst [vmem:[#allocation2 + $0x8] sm:$0xff] 0.0
      %39 = vst [vmem:[#allocation2 + $0x10] sm:$0xff] 0.0
      %40 = vst [vmem:[#allocation2 + $0x18] sm:$0xff] 0.0
      %41 = vst [vmem:[#allocation2 + $0x20] sm:$0xff] 0.0
      %42 = vst [vmem:[#allocation2 + $0x28] sm:$0xff] 0.0
      %43 = vst [vmem:[#allocation2 + $0x30] sm:$0xff] 0.0
      %44 = vst [vmem:[#allocation2 + $0x38] sm:$0xff] 0.0
      %45 = vst [vmem:[#allocation2 + $0x40] sm:$0xff] 0.0
      %46 = vst [vmem:[#allocation2 + $0x48] sm:$0xff] 0.0
      %47 = vst [vmem:[#allocation2 + $0x50] sm:$0xff] 0.0
      %48 = vst [vmem:[#allocation2 + $0x58] sm:$0xff] 0.0
      %49 = vst [vmem:[#allocation2 + $0x60] sm:$0xff] 0.0
      %50 = vst [vmem:[#allocation2 + $0x68] sm:$0xff] 0.0
      %51 = vst [vmem:[#allocation2 + $0x70] sm:$0xff] 0.0
      %52 = vst [vmem:[#allocation2 + $0x78] sm:$0xff] 0.0
      %53 = vst [vmem:[#allocation2 + $0x80] sm:$0xff] 0.0
      %54 = vst [vmem:[#allocation2 + $0x88] sm:$0xff] 0.0
      %55 = vst [vmem:[#allocation2 + $0x90] sm:$0xff] 0.0
      %56 = vst [vmem:[#allocation2 + $0x98] sm:$0xff] 0.0
      %57 = vst [vmem:[#allocation2 + $0xa0] sm:$0xff] 0.0
      %58 = vst [vmem:[#allocation2 + $0xa8] sm:$0xff] 0.0
      %59 = vst [vmem:[#allocation2 + $0xb0] sm:$0xff] 0.0
      %60 = vst [vmem:[#allocation2 + $0xb8] sm:$0xff] 0.0
      %61 = vst [vmem:[#allocation2 + $0xc0] sm:$0xff] 0.0
      %62 = vst [vmem:[#allocation2 + $0xc8] sm:$0xff] 0.0
      %63 = vst [vmem:[#allocation2 + $0xd0] sm:$0xff] 0.0
      %64 = vst [vmem:[#allocation2 + $0xd8] sm:$0xff] 0.0
      %65 = vst [vmem:[#allocation2 + $0xe0] sm:$0xff] 0.0
      %66 = vst [vmem:[#allocation2 + $0xe8] sm:$0xff] 0.0
      %67 = vst [vmem:[#allocation2 + $0xf0] sm:$0xff] 0.0
      %68 = vst [vmem:[#allocation2 + $0xf8] sm:$0xff] 0.0
      %69 = vst [vmem:[#allocation2 + $0x100] sm:$0xff] 0.0
      %70 = vst [vmem:[#allocation2 + $0x108] sm:$0xff] 0.0
      %71 = vst [vmem:[#allocation2 + $0x110] sm:$0xff] 0.0
      %72 = vst [vmem:[#allocation2 + $0x118] sm:$0xff] 0.0
      %73 = vst [vmem:[#allocation2 + $0x120] sm:$0xff] 0.0
      %74 = vst [vmem:[#allocation2 + $0x128] sm:$0xff] 0.0
      %75 = vst [vmem:[#allocation2 + $0x130] sm:$0xff] 0.0
      %76 = vst [vmem:[#allocation2 + $0x138] sm:$0xff] 0.0
      %77 = vst [vmem:[#allocation2 + $0x140] sm:$0xff] 0.0
      %78 = vst [vmem:[#allocation2 + $0x148] sm:$0xff] 0.0
      %79 = vst [vmem:[#allocation2 + $0x150] sm:$0xff] 0.0
      %80 = vst [vmem:[#allocation2 + $0x158] sm:$0xff] 0.0
      %81 = vst [vmem:[#allocation2 + $0x160] sm:$0xff] 0.0
      %82 = vst [vmem:[#allocation2 + $0x168] sm:$0xff] 0.0
      %83 = vst [vmem:[#allocation2 + $0x170] sm:$0xff] 0.0
      %84 = vst [vmem:[#allocation2 + $0x178] sm:$0xff] 0.0
      %85 = vst [vmem:[#allocation2 + $0x180] sm:$0xff] 0.0
      %86 = vst [vmem:[#allocation2 + $0x188] sm:$0xff] 0.0
      %87 = vst [vmem:[#allocation2 + $0x190] sm:$0xff] 0.0
      %88 = vst [vmem:[#allocation2 + $0x198] sm:$0xff] 0.0
      %89 = vst [vmem:[#allocation2 + $0x1a0] sm:$0xff] 0.0
      %90 = vst [vmem:[#allocation2 + $0x1a8] sm:$0xff] 0.0
      %91 = vst [vmem:[#allocation2 + $0x1b0] sm:$0xff] 0.0
      %92 = vst [vmem:[#allocation2 + $0x1b8] sm:$0xff] 0.0
      %93 = vst [vmem:[#allocation2 + $0x1c0] sm:$0xff] 0.0
      %94 = vst [vmem:[#allocation2 + $0x1c8] sm:$0xff] 0.0
      %95 = vst [vmem:[#allocation2 + $0x1d0] sm:$0xff] 0.0
      %96 = vst [vmem:[#allocation2 + $0x1d8] sm:$0xff] 0.0
      %97 = vst [vmem:[#allocation2 + $0x1e0] sm:$0xff] 0.0
      %98 = vst [vmem:[#allocation2 + $0x1e8] sm:$0xff] 0.0
      %99 = vst [vmem:[#allocation2 + $0x1f0] sm:$0xff] 0.0
      %100 = vst [vmem:[#allocation2 + $0x1f8] sm:$0xff] 0.0
    $region25: #{tpu_custom_call.1} parent=1 // pred_fallthru
      _
    %v101 = vld [vmem:[#allocation2] sm:$0xff]
    %v102 = vld [vmem:[#allocation2 + $0x8] sm:$0xff]
    %v103 = vld [vmem:[#allocation2 + $0x10] sm:$0xff]
    %v104 = vld [vmem:[#allocation2 + $0x18] sm:$0xff]
    %v105 = vld [vmem:[#allocation2 + $0x20] sm:$0xff]
    %v106 = vld [vmem:[#allocation2 + $0x28] sm:$0xff]
    %v107 = vld [vmem:[#allocation2 + $0x30] sm:$0xff]
    %v108 = vld [vmem:[#allocation2 + $0x38] sm:$0xff]
    %v109 = vld [vmem:[#allocation2 + $0x40] sm:$0xff]
    %v110 = vld [vmem:[#allocation2 + $0x48] sm:$0xff]
    %v111 = vld [vmem:[#allocation2 + $0x50] sm:$0xff]
    %v112 = vld [vmem:[#allocation2 + $0x58] sm:$0xff]
    %v113 = vld [vmem:[#allocation2 + $0x60] sm:$0xff]
    %v114 = vld [vmem:[#allocation2 + $0x68] sm:$0xff]
    %v115 = vld [vmem:[#allocation2 + $0x70] sm:$0xff]
    %v116 = vld [vmem:[#allocation2 + $0x78] sm:$0xff]
    %v117 = vld [vmem:[#allocation2 + $0x80] sm:$0xff]
    %v118 = vld [vmem:[#allocation2 + $0x88] sm:$0xff]
    %v119 = vld [vmem:[#allocation2 + $0x90] sm:$0xff]
    %v120 = vld [vmem:[#allocation2 + $0x98] sm:$0xff]
    %v121 = vld [vmem:[#allocation2 + $0xa0] sm:$0xff]
    %v122 = vld [vmem:[#allocation2 + $0xa8] sm:$0xff]
    %v123 = vld [vmem:[#allocation2 + $0xb0] sm:$0xff]
    %v124 = vld [vmem:[#allocation2 + $0xb8] sm:$0xff]
    %v125 = vld [vmem:[#allocation2 + $0xc0] sm:$0xff]
    %v126 = vld [vmem:[#allocation2 + $0xc8] sm:$0xff]
    %v127 = vld [vmem:[#allocation2 + $0xd0] sm:$0xff]
    %v128 = vld [vmem:[#allocation2 + $0xd8] sm:$0xff]
    %v129 = vld [vmem:[#allocation2 + $0xe0] sm:$0xff]
    %v130 = vld [vmem:[#allocation2 + $0xe8] sm:$0xff]
    %v131 = vld [vmem:[#allocation2 + $0xf0] sm:$0xff]
    %v132 = vld [vmem:[#allocation2 + $0xf8] sm:$0xff]
    %v133 = vld [vmem:[#allocation2 + $0x100] sm:$0xff]
    %v134 = vld [vmem:[#allocation2 + $0x108] sm:$0xff]
    %v135 = vld [vmem:[#allocation2 + $0x110] sm:$0xff]
    %v136 = vld [vmem:[#allocation2 + $0x118] sm:$0xff]
    %v137 = vld [vmem:[#allocation2 + $0x120] sm:$0xff]
    %v138 = vld [vmem:[#allocation2 + $0x128] sm:$0xff]
    %v139 = vld [vmem:[#allocation2 + $0x130] sm:$0xff]
    %v140 = vld [vmem:[#allocation2 + $0x138] sm:$0xff]
    %v141 = vld [vmem:[#allocation2 + $0x140] sm:$0xff]
    %v142 = vld [vmem:[#allocation2 + $0x148] sm:$0xff]
    %v143 = vld [vmem:[#allocation2 + $0x150] sm:$0xff]
    %v144 = vld [vmem:[#allocation2 + $0x158] sm:$0xff]
    %v145 = vld [vmem:[#allocation2 + $0x160] sm:$0xff]
    %v146 = vld [vmem:[#allocation2 + $0x168] sm:$0xff]
    %v147 = vld [vmem:[#allocation2 + $0x170] sm:$0xff]
    %v148 = vld [vmem:[#allocation2 + $0x178] sm:$0xff]
    %v149 = vld [vmem:[#allocation2 + $0x180] sm:$0xff]
    %v150 = vld [vmem:[#allocation2 + $0x188] sm:$0xff]
    %v151 = vld [vmem:[#allocation2 + $0x190] sm:$0xff]
    %v152 = vld [vmem:[#allocation2 + $0x198] sm:$0xff]
    %v153 = vld [vmem:[#allocation2 + $0x1a0] sm:$0xff]
    %v154 = vld [vmem:[#allocation2 + $0x1a8] sm:$0xff]
    %v155 = vld [vmem:[#allocation2 + $0x1b0] sm:$0xff]
    %v156 = vld [vmem:[#allocation2 + $0x1b8] sm:$0xff]
    %v157 = vld [vmem:[#allocation2 + $0x1c0] sm:$0xff]
    %v158 = vld [vmem:[#allocation2 + $0x1c8] sm:$0xff]
    %v159 = vld [vmem:[#allocation2 + $0x1d0] sm:$0xff]
    %v160 = vld [vmem:[#allocation2 + $0x1d8] sm:$0xff]
    %v161 = vld [vmem:[#allocation2 + $0x1e0] sm:$0xff]
    %v162 = vld [vmem:[#allocation2 + $0x1e8] sm:$0xff]
    %v163 = vld [vmem:[#allocation2 + $0x1f0] sm:$0xff]
    %v164 = vld [vmem:[#allocation2 + $0x1f8] sm:$0xff]
    %v165 = vld [vmem:[%s0] sm:$0xf]
    %v166 = vld [vmem:[%s0 + $0x4] sm:$0xf]
    %v167 = vld [vmem:[%s0 + $0x8] sm:$0xf]
    %v168 = vld [vmem:[%s0 + $0xc] sm:$0xf]
    %v169 = vld [vmem:[%s0 + $0x10] sm:$0xf]
    %v170 = vld [vmem:[%s0 + $0x14] sm:$0xf]
    %v171 = vld [vmem:[%s0 + $0x18] sm:$0xf]
    %v172 = vld [vmem:[%s0 + $0x1c] sm:$0xf]
    %v173 = vld [vmem:[%s0 + $0x20] sm:$0xf]
    %v174 = vld [vmem:[%s0 + $0x24] sm:$0xf]
    %v175 = vld [vmem:[%s0 + $0x28] sm:$0xf]
    %v176 = vld [vmem:[%s0 + $0x2c] sm:$0xf]
    %v177 = vld [vmem:[%s0 + $0x30] sm:$0xf]
    %v178 = vld [vmem:[%s0 + $0x34] sm:$0xf]
    %v179 = vld [vmem:[%s0 + $0x38] sm:$0xf]
    %v180 = vld [vmem:[%s0 + $0x3c] sm:$0xf]
    %v181 = vld [vmem:[%s0 + $0x40] sm:$0xf]
    %v182 = vld [vmem:[%s0 + $0x44] sm:$0xf]
    %v183 = vld [vmem:[%s0 + $0x48] sm:$0xf]
    %v184 = vld [vmem:[%s0 + $0x4c] sm:$0xf]
    %v185 = vld [vmem:[%s0 + $0x50] sm:$0xf]
    %v186 = vld [vmem:[%s0 + $0x54] sm:$0xf]
    %v187 = vld [vmem:[%s0 + $0x58] sm:$0xf]
    %v188 = vld [vmem:[%s0 + $0x5c] sm:$0xf]
    %v189 = vld [vmem:[%s0 + $0x60] sm:$0xf]
    %v190 = vld [vmem:[%s0 + $0x64] sm:$0xf]
    %v191 = vld [vmem:[%s0 + $0x68] sm:$0xf]
    %v192 = vld [vmem:[%s0 + $0x6c] sm:$0xf]
    %v193 = vld [vmem:[%s0 + $0x70] sm:$0xf]
    %v194 = vld [vmem:[%s0 + $0x74] sm:$0xf]
    %v195 = vld [vmem:[%s0 + $0x78] sm:$0xf]
    %v196 = vld [vmem:[%s0 + $0x7c] sm:$0xf]
    %v197 = vld [vmem:[%s0 + $0x80] sm:$0xf]
    %v198 = vld [vmem:[%s0 + $0x84] sm:$0xf]
    %v199 = vld [vmem:[%s0 + $0x88] sm:$0xf]
    %v200 = vld [vmem:[%s0 + $0x8c] sm:$0xf]
    %v201 = vld [vmem:[%s0 + $0x90] sm:$0xf]
    %v202 = vld [vmem:[%s0 + $0x94] sm:$0xf]
    %v203 = vld [vmem:[%s0 + $0x98] sm:$0xf]
    %v204 = vld [vmem:[%s0 + $0x9c] sm:$0xf]
    %v205 = vld [vmem:[%s0 + $0xa0] sm:$0xf]
    %v206 = vld [vmem:[%s0 + $0xa4] sm:$0xf]
    %v207 = vld [vmem:[%s0 + $0xa8] sm:$0xf]
    %v208 = vld [vmem:[%s0 + $0xac] sm:$0xf]
    %v209 = vld [vmem:[%s0 + $0xb0] sm:$0xf]
    %v210 = vld [vmem:[%s0 + $0xb4] sm:$0xf]
    %v211 = vld [vmem:[%s0 + $0xb8] sm:$0xf]
    %v212 = vld [vmem:[%s0 + $0xbc] sm:$0xf]
    %v213 = vld [vmem:[%s0 + $0xc0] sm:$0xf]
    %v214 = vld [vmem:[%s0 + $0xc4] sm:$0xf]
    %v215 = vld [vmem:[%s0 + $0xc8] sm:$0xf]
    %v216 = vld [vmem:[%s0 + $0xcc] sm:$0xf]
    %v217 = vld [vmem:[%s0 + $0xd0] sm:$0xf]
    %v218 = vld [vmem:[%s0 + $0xd4] sm:$0xf]
    %v219 = vld [vmem:[%s0 + $0xd8] sm:$0xf]
    %v220 = vld [vmem:[%s0 + $0xdc] sm:$0xf]
    %v221 = vld [vmem:[%s0 + $0xe0] sm:$0xf]
    %v222 = vld [vmem:[%s0 + $0xe4] sm:$0xf]
    %v223 = vld [vmem:[%s0 + $0xe8] sm:$0xf]
    %v224 = vld [vmem:[%s0 + $0xec] sm:$0xf]
    %v225 = vld [vmem:[%s0 + $0xf0] sm:$0xf]
    %v226 = vld [vmem:[%s0 + $0xf4] sm:$0xf]
    %v227 = vld [vmem:[%s0 + $0xf8] sm:$0xf]
    %v228 = vld [vmem:[%s0 + $0xfc] sm:$0xf]
    %v229 = vld [vmem:[%s1] sm:$0x3]
    %v294 = vunpack.c.l.b16 %v165
    %v295 = vunpack.c.l.b16 %v166
    %v296 = vunpack.c.l.b16 %v167
    %v297 = vunpack.c.l.b16 %v168
    %v298 = vunpack.c.l.b16 %v169
    %v299 = vunpack.c.l.b16 %v170
    %v300 = vunpack.c.l.b16 %v171
    %v301 = vunpack.c.l.b16 %v172
    %v302 = vunpack.c.l.b16 %v173
    %v303 = vunpack.c.l.b16 %v174
    %v304 = vunpack.c.l.b16 %v175
    %v305 = vunpack.c.l.b16 %v176
    %v306 = vunpack.c.l.b16 %v177
    %v307 = vunpack.c.l.b16 %v178
    %v308 = vunpack.c.l.b16 %v179
    %v309 = vunpack.c.l.b16 %v180
    %v310 = vunpack.c.l.b16 %v181
    %v311 = vunpack.c.l.b16 %v182
    %v312 = vunpack.c.l.b16 %v183
    %v313 = vunpack.c.l.b16 %v184
    %v314 = vunpack.c.l.b16 %v185
    %v315 = vunpack.c.l.b16 %v186
    %v316 = vunpack.c.l.b16 %v187
    %v317 = vunpack.c.l.b16 %v188
    %v318 = vunpack.c.l.b16 %v189
    %v319 = vunpack.c.l.b16 %v190
    %v320 = vunpack.c.l.b16 %v191
    %v321 = vunpack.c.l.b16 %v192
    %v322 = vunpack.c.l.b16 %v193
    %v323 = vunpack.c.l.b16 %v194
    %v324 = vunpack.c.l.b16 %v195
    %v325 = vunpack.c.l.b16 %v196
    %v326 = vunpack.c.l.b16 %v197
    %v327 = vunpack.c.l.b16 %v198
    %v328 = vunpack.c.l.b16 %v199
    %v329 = vunpack.c.l.b16 %v200
    %v330 = vunpack.c.l.b16 %v201
    %v331 = vunpack.c.l.b16 %v202
    %v332 = vunpack.c.l.b16 %v203
    %v333 = vunpack.c.l.b16 %v204
    %v334 = vunpack.c.l.b16 %v205
    %v335 = vunpack.c.l.b16 %v206
    %v336 = vunpack.c.l.b16 %v207
    %v337 = vunpack.c.l.b16 %v208
    %v338 = vunpack.c.l.b16 %v209
    %v339 = vunpack.c.l.b16 %v210
    %v340 = vunpack.c.l.b16 %v211
    %v341 = vunpack.c.l.b16 %v212
    %v342 = vunpack.c.l.b16 %v213
    %v343 = vunpack.c.l.b16 %v214
    %v344 = vunpack.c.l.b16 %v215
    %v345 = vunpack.c.l.b16 %v216
    %v346 = vunpack.c.l.b16 %v217
    %v347 = vunpack.c.l.b16 %v218
    %v348 = vunpack.c.l.b16 %v219
    %v349 = vunpack.c.l.b16 %v220
    %v350 = vunpack.c.l.b16 %v221
    %v351 = vunpack.c.l.b16 %v222
    %v352 = vunpack.c.l.b16 %v223
    %v353 = vunpack.c.l.b16 %v224
    %v354 = vunpack.c.l.b16 %v225
    %v355 = vunpack.c.l.b16 %v226
    %v356 = vunpack.c.l.b16 %v227
    %v357 = vunpack.c.l.b16 %v228
    %v358 = vpack.c.b16 %v295, %v294
    %v359 = vpack.c.b16 %v297, %v296
    %v360 = vpack.c.b16 %v299, %v298
    %v361 = vpack.c.b16 %v301, %v300
    %v362 = vpack.c.b16 %v303, %v302
    %v363 = vpack.c.b16 %v305, %v304
    %v364 = vpack.c.b16 %v307, %v306
    %v365 = vpack.c.b16 %v309, %v308
    %v366 = vpack.c.b16 %v311, %v310
    %v367 = vpack.c.b16 %v313, %v312
    %v368 = vpack.c.b16 %v315, %v314
    %v369 = vpack.c.b16 %v317, %v316
    %v370 = vpack.c.b16 %v319, %v318
    %v371 = vpack.c.b16 %v321, %v320
    %v372 = vpack.c.b16 %v323, %v322
    %v373 = vpack.c.b16 %v325, %v324
    %v374 = vpack.c.b16 %v327, %v326
    %v375 = vpack.c.b16 %v329, %v328
    %v376 = vpack.c.b16 %v331, %v330
    %v377 = vpack.c.b16 %v333, %v332
    %v378 = vpack.c.b16 %v335, %v334
    %v379 = vpack.c.b16 %v337, %v336
    %v380 = vpack.c.b16 %v339, %v338
    %v381 = vpack.c.b16 %v341, %v340
    %v382 = vpack.c.b16 %v343, %v342
    %v383 = vpack.c.b16 %v345, %v344
    %v384 = vpack.c.b16 %v347, %v346
    %v385 = vpack.c.b16 %v349, %v348
    %v386 = vpack.c.b16 %v351, %v350
    %v387 = vpack.c.b16 %v353, %v352
    %v388 = vpack.c.b16 %v355, %v354
    %v389 = vpack.c.b16 %v357, %v356
    %vm390 = vcmask 23552
    %v392 = vsel %vm390, %v358, 0
    %v395 = vsel %vm390, %v359, 0
    %v398 = vsel %vm390, %v360, 0
    %v401 = vsel %vm390, %v361, 0
    %v404 = vsel %vm390, %v362, 0
    %v407 = vsel %vm390, %v363, 0
    %v410 = vsel %vm390, %v364, 0
    %v413 = vsel %vm390, %v365, 0
    %v416 = vsel %vm390, %v366, 0
    %v419 = vsel %vm390, %v367, 0
    %v422 = vsel %vm390, %v368, 0
    %v425 = vsel %vm390, %v369, 0
    %v428 = vsel %vm390, %v370, 0
    %v431 = vsel %vm390, %v371, 0
    %v434 = vsel %vm390, %v372, 0
    %v437 = vsel %vm390, %v373, 0
    %v440 = vsel %vm390, %v374, 0
    %v443 = vsel %vm390, %v375, 0
    %v446 = vsel %vm390, %v376, 0
    %v449 = vsel %vm390, %v377, 0
    %v452 = vsel %vm390, %v378, 0
    %v455 = vsel %vm390, %v379, 0
    %v458 = vsel %vm390, %v380, 0
    %v461 = vsel %vm390, %v381, 0
    %v464 = vsel %vm390, %v382, 0
    %v467 = vsel %vm390, %v383, 0
    %v470 = vsel %vm390, %v384, 0
    %v473 = vsel %vm390, %v385, 0
    %v476 = vsel %vm390, %v386, 0
    %v479 = vsel %vm390, %v387, 0
    %v482 = vsel %vm390, %v388, 0
    %v485 = vsel %vm390, %v389, 0
    %vm487 = vcmask 1040384
    %vm488 = vcmask 1041408
    %v489 = vsel %vm487, 4294967295, 65535
    %v490 = vsel %vm488, %v489, 0
    %v492 = vand.u32 %v229, %v490
    %494 = vmatprep.subr.bf16.mxu0 0
    %495 = vmatpush1.bf16.msra.mxu0 0
    %496 = vmatprep.subr.bf16.mxu0 0
    %497 = vmatpush1.bf16.msra.mxu0 0
    %498 = vmatprep.subr.bf16.mxu0 0
    %499 = vmatpush1.bf16.msra.mxu0 0
    %500 = vmatprep.subr.bf16.mxu0 0
    %501 = vmatpush1.bf16.msra.mxu0 0
    %502 = vmatprep.subr.bf16.mxu0 0
    %503 = vmatpush1.bf16.msra.mxu0 0
    %504 = vmatprep.subr.bf16.mxu0 0
    %505 = vmatpush1.bf16.msra.mxu0 0
    %506 = vmatprep.subr.bf16.mxu0 0
    %507 = vmatpush1.bf16.msra.mxu0 0
    %508 = vmatprep.subr.bf16.mxu0 0
    %509 = vmatpush1.bf16.msra.mxu0 %v492
    %510 = vmatprep.subr.bf16.mxu0 0
    %511 = vmatpush2.bf16.msra.mxu0 0
    %512 = vmatprep.subr.bf16.mxu0 0
    %513 = vmatpush2.bf16.msra.mxu0 0
    %514 = vmatprep.subr.bf16.mxu0 0
    %515 = vmatpush2.bf16.msra.mxu0 0
    %516 = vmatprep.subr.bf16.mxu0 0
    %517 = vmatpush2.bf16.msra.mxu0 0
    %518 = vmatprep.subr.bf16.mxu0 0
    %519 = vmatpush2.bf16.msra.mxu0 0
    %520 = vmatprep.subr.bf16.mxu0 0
    %521 = vmatpush2.bf16.msra.mxu0 0
    %522 = vmatprep.subr.bf16.mxu0 0
    %523 = vmatpush2.bf16.msra.mxu0 0
    %524 = vmatprep.subr.bf16.mxu0 0
    %525 = vmatpush2.bf16.msra.mxu0 0
    %526 = vmatprep.mubr.bf16.mxu0 0
    %527 = vmatmul.mubr.bf16.gmra.mxu0 %v392
    %v528 = vpop.f32.mrf.mxu0
    %v529 = vadd.f32 0.0, %v528
    %v530 = vpop.f32.mrf.mxu0
    %v531 = vpop.f32.mrf.mxu0
    %v532 = vadd.f32 0.0, %v531
    %v533 = vpop.f32.mrf.mxu0
    %534 = vmatprep.mubr.bf16.mxu0 0
    %535 = vmatmul.mubr.bf16.gmra.mxu0 %v395
    %v536 = vpop.f32.mrf.mxu0
    %v537 = vadd.f32 0.0, %v536
    %v538 = vpop.f32.mrf.mxu0
    %v539 = vpop.f32.mrf.mxu0
    %v540 = vadd.f32 0.0, %v539
    %v541 = vpop.f32.mrf.mxu0
    %542 = vmatprep.mubr.bf16.mxu0 0
    %543 = vmatmul.mubr.bf16.gmra.mxu0 %v398
    %v544 = vpop.f32.mrf.mxu0
    %v545 = vadd.f32 0.0, %v544
    %v546 = vpop.f32.mrf.mxu0
    %v547 = vpop.f32.mrf.mxu0
    %v548 = vadd.f32 0.0, %v547
    %v549 = vpop.f32.mrf.mxu0
    %550 = vmatprep.mubr.bf16.mxu0 0
    %551 = vmatmul.mubr.bf16.gmra.mxu0 %v401
    %v552 = vpop.f32.mrf.mxu0
    %v553 = vadd.f32 0.0, %v552
    %v554 = vpop.f32.mrf.mxu0
    %v555 = vpop.f32.mrf.mxu0
    %v556 = vadd.f32 0.0, %v555
    %v557 = vpop.f32.mrf.mxu0
    %558 = vmatprep.mubr.bf16.mxu0 0
    %559 = vmatmul.mubr.bf16.gmra.mxu0 %v404
    %v560 = vpop.f32.mrf.mxu0
    %v561 = vadd.f32 0.0, %v560
    %v562 = vpop.f32.mrf.mxu0
    %v563 = vpop.f32.mrf.mxu0
    %v564 = vadd.f32 0.0, %v563
    %v565 = vpop.f32.mrf.mxu0
    %566 = vmatprep.mubr.bf16.mxu0 0
    %567 = vmatmul.mubr.bf16.gmra.mxu0 %v407
    %v568 = vpop.f32.mrf.mxu0
    %v569 = vadd.f32 0.0, %v568
    %v570 = vpop.f32.mrf.mxu0
    %v571 = vpop.f32.mrf.mxu0
    %v572 = vadd.f32 0.0, %v571
    %v573 = vpop.f32.mrf.mxu0
    %574 = vmatprep.mubr.bf16.mxu0 0
    %575 = vmatmul.mubr.bf16.gmra.mxu0 %v410
    %v576 = vpop.f32.mrf.mxu0
    %v577 = vadd.f32 0.0, %v576
    %v578 = vpop.f32.mrf.mxu0
    %v579 = vpop.f32.mrf.mxu0
    %v580 = vadd.f32 0.0, %v579
    %v581 = vpop.f32.mrf.mxu0
    %582 = vmatprep.mubr.bf16.mxu0 0
    %583 = vmatmul.mubr.bf16.gmra.mxu0 %v413
    %v584 = vpop.f32.mrf.mxu0
    %v585 = vadd.f32 0.0, %v584
    %v586 = vpop.f32.mrf.mxu0
    %v587 = vpop.f32.mrf.mxu0
    %v588 = vadd.f32 0.0, %v587
    %v589 = vpop.f32.mrf.mxu0
    %590 = vmatprep.mubr.bf16.mxu0 0
    %591 = vmatmul.mubr.bf16.gmra.mxu0 %v416
    %v592 = vpop.f32.mrf.mxu0
    %v593 = vadd.f32 0.0, %v592
    %v594 = vpop.f32.mrf.mxu0
    %v595 = vpop.f32.mrf.mxu0
    %v596 = vadd.f32 0.0, %v595
    %v597 = vpop.f32.mrf.mxu0
    %598 = vmatprep.mubr.bf16.mxu0 0
    %599 = vmatmul.mubr.bf16.gmra.mxu0 %v419
    %v600 = vpop.f32.mrf.mxu0
    %v601 = vadd.f32 0.0, %v600
    %v602 = vpop.f32.mrf.mxu0
    %v603 = vpop.f32.mrf.mxu0
    %v604 = vadd.f32 0.0, %v603
    %v605 = vpop.f32.mrf.mxu0
    %606 = vmatprep.mubr.bf16.mxu0 0
    %607 = vmatmul.mubr.bf16.gmra.mxu0 %v422
    %v608 = vpop.f32.mrf.mxu0
    %v609 = vadd.f32 0.0, %v608
    %v610 = vpop.f32.mrf.mxu0
    %v611 = vpop.f32.mrf.mxu0
    %v612 = vadd.f32 0.0, %v611
    %v613 = vpop.f32.mrf.mxu0
    %614 = vmatprep.mubr.bf16.mxu0 0
    %615 = vmatmul.mubr.bf16.gmra.mxu0 %v425
    %v616 = vpop.f32.mrf.mxu0
    %v617 = vadd.f32 0.0, %v616
    %v618 = vpop.f32.mrf.mxu0
    %v619 = vpop.f32.mrf.mxu0
    %v620 = vadd.f32 0.0, %v619
    %v621 = vpop.f32.mrf.mxu0
    %622 = vmatprep.mubr.bf16.mxu0 0
    %623 = vmatmul.mubr.bf16.gmra.mxu0 %v428
    %v624 = vpop.f32.mrf.mxu0
    %v625 = vadd.f32 0.0, %v624
    %v626 = vpop.f32.mrf.mxu0
    %v627 = vpop.f32.mrf.mxu0
    %v628 = vadd.f32 0.0, %v627
    %v629 = vpop.f32.mrf.mxu0
    %630 = vmatprep.mubr.bf16.mxu0 0
    %631 = vmatmul.mubr.bf16.gmra.mxu0 %v431
    %v632 = vpop.f32.mrf.mxu0
    %v633 = vadd.f32 0.0, %v632
    %v634 = vpop.f32.mrf.mxu0
    %v635 = vpop.f32.mrf.mxu0
    %v636 = vadd.f32 0.0, %v635
    %v637 = vpop.f32.mrf.mxu0
    %638 = vmatprep.mubr.bf16.mxu0 0
    %639 = vmatmul.mubr.bf16.gmra.mxu0 %v434
    %v640 = vpop.f32.mrf.mxu0
    %v641 = vadd.f32 0.0, %v640
    %v642 = vpop.f32.mrf.mxu0
    %v643 = vpop.f32.mrf.mxu0
    %v644 = vadd.f32 0.0, %v643
    %v645 = vpop.f32.mrf.mxu0
    %646 = vmatprep.mubr.bf16.mxu0 0
    %647 = vmatmul.mubr.bf16.gmra.mxu0 %v437
    %v648 = vpop.f32.mrf.mxu0
    %v649 = vadd.f32 0.0, %v648
    %v650 = vpop.f32.mrf.mxu0
    %v651 = vpop.f32.mrf.mxu0
    %v652 = vadd.f32 0.0, %v651
    %v653 = vpop.f32.mrf.mxu0
    %654 = vmatprep.mubr.bf16.mxu0 0
    %655 = vmatmul.mubr.bf16.gmra.mxu0 %v440
    %v656 = vpop.f32.mrf.mxu0
    %v657 = vadd.f32 0.0, %v656
    %v658 = vpop.f32.mrf.mxu0
    %v659 = vpop.f32.mrf.mxu0
    %v660 = vadd.f32 0.0, %v659
    %v661 = vpop.f32.mrf.mxu0
    %662 = vmatprep.mubr.bf16.mxu0 0
    %663 = vmatmul.mubr.bf16.gmra.mxu0 %v443
    %v664 = vpop.f32.mrf.mxu0
    %v665 = vadd.f32 0.0, %v664
    %v666 = vpop.f32.mrf.mxu0
    %v667 = vpop.f32.mrf.mxu0
    %v668 = vadd.f32 0.0, %v667
    %v669 = vpop.f32.mrf.mxu0
    %670 = vmatprep.mubr.bf16.mxu0 0
    %671 = vmatmul.mubr.bf16.gmra.mxu0 %v446
    %v672 = vpop.f32.mrf.mxu0
    %v673 = vadd.f32 0.0, %v672
    %v674 = vpop.f32.mrf.mxu0
    %v675 = vpop.f32.mrf.mxu0
    %v676 = vadd.f32 0.0, %v675
    %v677 = vpop.f32.mrf.mxu0
    %678 = vmatprep.mubr.bf16.mxu0 0
    %679 = vmatmul.mubr.bf16.gmra.mxu0 %v449
    %v680 = vpop.f32.mrf.mxu0
    %v681 = vadd.f32 0.0, %v680
    %v682 = vpop.f32.mrf.mxu0
    %v683 = vpop.f32.mrf.mxu0
    %v684 = vadd.f32 0.0, %v683
    %v685 = vpop.f32.mrf.mxu0
    %686 = vmatprep.mubr.bf16.mxu0 0
    %687 = vmatmul.mubr.bf16.gmra.mxu0 %v452
    %v688 = vpop.f32.mrf.mxu0
    %v689 = vadd.f32 0.0, %v688
    %v690 = vpop.f32.mrf.mxu0
    %v691 = vpop.f32.mrf.mxu0
    %v692 = vadd.f32 0.0, %v691
    %v693 = vpop.f32.mrf.mxu0
    %694 = vmatprep.mubr.bf16.mxu0 0
    %695 = vmatmul.mubr.bf16.gmra.mxu0 %v455
    %v696 = vpop.f32.mrf.mxu0
    %v697 = vadd.f32 0.0, %v696
    %v698 = vpop.f32.mrf.mxu0
    %v699 = vpop.f32.mrf.mxu0
    %v700 = vadd.f32 0.0, %v699
    %v701 = vpop.f32.mrf.mxu0
    %702 = vmatprep.mubr.bf16.mxu0 0
    %703 = vmatmul.mubr.bf16.gmra.mxu0 %v458
    %v704 = vpop.f32.mrf.mxu0
    %v705 = vadd.f32 0.0, %v704
    %v706 = vpop.f32.mrf.mxu0
    %v707 = vpop.f32.mrf.mxu0
    %v708 = vadd.f32 0.0, %v707
    %v709 = vpop.f32.mrf.mxu0
    %710 = vmatprep.mubr.bf16.mxu0 0
    %711 = vmatmul.mubr.bf16.gmra.mxu0 %v461
    %v712 = vpop.f32.mrf.mxu0
    %v713 = vadd.f32 0.0, %v712
    %v714 = vpop.f32.mrf.mxu0
    %v715 = vpop.f32.mrf.mxu0
    %v716 = vadd.f32 0.0, %v715
    %v717 = vpop.f32.mrf.mxu0
    %718 = vmatprep.mubr.bf16.mxu0 0
    %719 = vmatmul.mubr.bf16.gmra.mxu0 %v464
    %v720 = vpop.f32.mrf.mxu0
    %v721 = vadd.f32 0.0, %v720
    %v722 = vpop.f32.mrf.mxu0
    %v723 = vpop.f32.mrf.mxu0
    %v724 = vadd.f32 0.0, %v723
    %v725 = vpop.f32.mrf.mxu0
    %726 = vmatprep.mubr.bf16.mxu0 0
    %727 = vmatmul.mubr.bf16.gmra.mxu0 %v467
    %v728 = vpop.f32.mrf.mxu0
    %v729 = vadd.f32 0.0, %v728
    %v730 = vpop.f32.mrf.mxu0
    %v731 = vpop.f32.mrf.mxu0
    %v732 = vadd.f32 0.0, %v731
    %v733 = vpop.f32.mrf.mxu0
    %734 = vmatprep.mubr.bf16.mxu0 0
    %735 = vmatmul.mubr.bf16.gmra.mxu0 %v470
    %v736 = vpop.f32.mrf.mxu0
    %v737 = vadd.f32 0.0, %v736
    %v738 = vpop.f32.mrf.mxu0
    %v739 = vpop.f32.mrf.mxu0
    %v740 = vadd.f32 0.0, %v739
    %v741 = vpop.f32.mrf.mxu0
    %742 = vmatprep.mubr.bf16.mxu0 0
    %743 = vmatmul.mubr.bf16.gmra.mxu0 %v473
    %v744 = vpop.f32.mrf.mxu0
    %v745 = vadd.f32 0.0, %v744
    %v746 = vpop.f32.mrf.mxu0
    %v747 = vpop.f32.mrf.mxu0
    %v748 = vadd.f32 0.0, %v747
    %v749 = vpop.f32.mrf.mxu0
    %750 = vmatprep.mubr.bf16.mxu0 0
    %751 = vmatmul.mubr.bf16.gmra.mxu0 %v476
    %v752 = vpop.f32.mrf.mxu0
    %v753 = vadd.f32 0.0, %v752
    %v754 = vpop.f32.mrf.mxu0
    %v755 = vpop.f32.mrf.mxu0
    %v756 = vadd.f32 0.0, %v755
    %v757 = vpop.f32.mrf.mxu0
    %758 = vmatprep.mubr.bf16.mxu0 0
    %759 = vmatmul.mubr.bf16.gmra.mxu0 %v479
    %v760 = vpop.f32.mrf.mxu0
    %v761 = vadd.f32 0.0, %v760
    %v762 = vpop.f32.mrf.mxu0
    %v763 = vpop.f32.mrf.mxu0
    %v764 = vadd.f32 0.0, %v763
    %v765 = vpop.f32.mrf.mxu0
    %766 = vmatprep.mubr.bf16.mxu0 0
    %767 = vmatmul.mubr.bf16.gmra.mxu0 %v482
    %v768 = vpop.f32.mrf.mxu0
    %v769 = vadd.f32 0.0, %v768
    %v770 = vpop.f32.mrf.mxu0
    %v771 = vpop.f32.mrf.mxu0
    %v772 = vadd.f32 0.0, %v771
    %v773 = vpop.f32.mrf.mxu0
    %774 = vmatprep.mubr.bf16.mxu0 0
    %775 = vmatmul.mubr.bf16.gmra.mxu0 %v485
    %v776 = vpop.f32.mrf.mxu0
    %v777 = vadd.f32 0.0, %v776
    %v778 = vpop.f32.mrf.mxu0
    %v779 = vpop.f32.mrf.mxu0
    %v780 = vadd.f32 0.0, %v779
    %v781 = vpop.f32.mrf.mxu0
    %782 = vdwg.mxu0
    %v783 = vadd.f32 %v101, %v529
    %v784 = vadd.f32 %v102, %v532
    %v785 = vadd.f32 %v103, %v537
    %v786 = vadd.f32 %v104, %v540
    %v787 = vadd.f32 %v105, %v545
    %v788 = vadd.f32 %v106, %v548
    %v789 = vadd.f32 %v107, %v553
    %v790 = vadd.f32 %v108, %v556
    %v791 = vadd.f32 %v109, %v561
    %v792 = vadd.f32 %v110, %v564
    %v793 = vadd.f32 %v111, %v569
    %v794 = vadd.f32 %v112, %v572
    %v795 = vadd.f32 %v113, %v577
    %v796 = vadd.f32 %v114, %v580
    %v797 = vadd.f32 %v115, %v585
    %v798 = vadd.f32 %v116, %v588
    %v799 = vadd.f32 %v117, %v593
    %v800 = vadd.f32 %v118, %v596
    %v801 = vadd.f32 %v119, %v601
    %v802 = vadd.f32 %v120, %v604
    %v803 = vadd.f32 %v121, %v609
    %v804 = vadd.f32 %v122, %v612
    %v805 = vadd.f32 %v123, %v617
    %v806 = vadd.f32 %v124, %v620
    %v807 = vadd.f32 %v125, %v625
    %v808 = vadd.f32 %v126, %v628
    %v809 = vadd.f32 %v127, %v633
    %v810 = vadd.f32 %v128, %v636
    %v811 = vadd.f32 %v129, %v641
    %v812 = vadd.f32 %v130, %v644
    %v813 = vadd.f32 %v131, %v649
    %v814 = vadd.f32 %v132, %v652
    %v815 = vadd.f32 %v133, %v657
    %v816 = vadd.f32 %v134, %v660
    %v817 = vadd.f32 %v135, %v665
    %v818 = vadd.f32 %v136, %v668
    %v819 = vadd.f32 %v137, %v673
    %v820 = vadd.f32 %v138, %v676
    %v821 = vadd.f32 %v139, %v681
    %v822 = vadd.f32 %v140, %v684
    %v823 = vadd.f32 %v141, %v689
    %v824 = vadd.f32 %v142, %v692
    %v825 = vadd.f32 %v143, %v697
    %v826 = vadd.f32 %v144, %v700
    %v827 = vadd.f32 %v145, %v705
    %v828 = vadd.f32 %v146, %v708
    %v829 = vadd.f32 %v147, %v713
    %v830 = vadd.f32 %v148, %v716
    %v831 = vadd.f32 %v149, %v721
    %v832 = vadd.f32 %v150, %v724
    %v833 = vadd.f32 %v151, %v729
    %v834 = vadd.f32 %v152, %v732
    %v835 = vadd.f32 %v153, %v737
    %v836 = vadd.f32 %v154, %v740
    %v837 = vadd.f32 %v155, %v745
    %v838 = vadd.f32 %v156, %v748
    %v839 = vadd.f32 %v157, %v753
    %v840 = vadd.f32 %v158, %v756
    %v841 = vadd.f32 %v159, %v761
    %v842 = vadd.f32 %v160, %v764
    %v843 = vadd.f32 %v161, %v769
    %v844 = vadd.f32 %v162, %v772
    %v845 = vadd.f32 %v163, %v777
    %v846 = vadd.f32 %v164, %v780
    %847 = vst [vmem:[#allocation2] sm:$0xff] %v783
    %848 = vst [vmem:[#allocation2 + $0x8] sm:$0xff] %v784
    %849 = vst [vmem:[#allocation2 + $0x10] sm:$0xff] %v785
    %850 = vst [vmem:[#allocation2 + $0x18] sm:$0xff] %v786
    %851 = vst [vmem:[#allocation2 + $0x20] sm:$0xff] %v787
    %852 = vst [vmem:[#allocation2 + $0x28] sm:$0xff] %v788
    %853 = vst [vmem:[#allocation2 + $0x30] sm:$0xff] %v789
    %854 = vst [vmem:[#allocation2 + $0x38] sm:$0xff] %v790
    %855 = vst [vmem:[#allocation2 + $0x40] sm:$0xff] %v791
    %856 = vst [vmem:[#allocation2 + $0x48] sm:$0xff] %v792
    %857 = vst [vmem:[#allocation2 + $0x50] sm:$0xff] %v793
    %858 = vst [vmem:[#allocation2 + $0x58] sm:$0xff] %v794
    %859 = vst [vmem:[#allocation2 + $0x60] sm:$0xff] %v795
    %860 = vst [vmem:[#allocation2 + $0x68] sm:$0xff] %v796
    %861 = vst [vmem:[#allocation2 + $0x70] sm:$0xff] %v797
    %862 = vst [vmem:[#allocation2 + $0x78] sm:$0xff] %v798
    %863 = vst [vmem:[#allocation2 + $0x80] sm:$0xff] %v799
    %864 = vst [vmem:[#allocation2 + $0x88] sm:$0xff] %v800
    %865 = vst [vmem:[#allocation2 + $0x90] sm:$0xff] %v801
    %866 = vst [vmem:[#allocation2 + $0x98] sm:$0xff] %v802
    %867 = vst [vmem:[#allocation2 + $0xa0] sm:$0xff] %v803
    %868 = vst [vmem:[#allocation2 + $0xa8] sm:$0xff] %v804
    %869 = vst [vmem:[#allocation2 + $0xb0] sm:$0xff] %v805
    %870 = vst [vmem:[#allocation2 + $0xb8] sm:$0xff] %v806
    %871 = vst [vmem:[#allocation2 + $0xc0] sm:$0xff] %v807
    %872 = vst [vmem:[#allocation2 + $0xc8] sm:$0xff] %v808
    %873 = vst [vmem:[#allocation2 + $0xd0] sm:$0xff] %v809
    %874 = vst [vmem:[#allocation2 + $0xd8] sm:$0xff] %v810
    %875 = vst [vmem:[#allocation2 + $0xe0] sm:$0xff] %v811
    %876 = vst [vmem:[#allocation2 + $0xe8] sm:$0xff] %v812
    %877 = vst [vmem:[#allocation2 + $0xf0] sm:$0xff] %v813
    %878 = vst [vmem:[#allocation2 + $0xf8] sm:$0xff] %v814
    %879 = vst [vmem:[#allocation2 + $0x100] sm:$0xff] %v815
    %880 = vst [vmem:[#allocation2 + $0x108] sm:$0xff] %v816
    %881 = vst [vmem:[#allocation2 + $0x110] sm:$0xff] %v817
    %882 = vst [vmem:[#allocation2 + $0x118] sm:$0xff] %v818
    %883 = vst [vmem:[#allocation2 + $0x120] sm:$0xff] %v819
    %884 = vst [vmem:[#allocation2 + $0x128] sm:$0xff] %v820
    %885 = vst [vmem:[#allocation2 + $0x130] sm:$0xff] %v821
    %886 = vst [vmem:[#allocation2 + $0x138] sm:$0xff] %v822
    %887 = vst [vmem:[#allocation2 + $0x140] sm:$0xff] %v823
    %888 = vst [vmem:[#allocation2 + $0x148] sm:$0xff] %v824
    %889 = vst [vmem:[#allocation2 + $0x150] sm:$0xff] %v825
    %890 = vst [vmem:[#allocation2 + $0x158] sm:$0xff] %v826
    %891 = vst [vmem:[#allocation2 + $0x160] sm:$0xff] %v827
    %892 = vst [vmem:[#allocation2 + $0x168] sm:$0xff] %v828
    %893 = vst [vmem:[#allocation2 + $0x170] sm:$0xff] %v829
    %894 = vst [vmem:[#allocation2 + $0x178] sm:$0xff] %v830
    %895 = vst [vmem:[#allocation2 + $0x180] sm:$0xff] %v831
    %896 = vst [vmem:[#allocation2 + $0x188] sm:$0xff] %v832
    %897 = vst [vmem:[#allocation2 + $0x190] sm:$0xff] %v833
    %898 = vst [vmem:[#allocation2 + $0x198] sm:$0xff] %v834
    %899 = vst [vmem:[#allocation2 + $0x1a0] sm:$0xff] %v835
    %900 = vst [vmem:[#allocation2 + $0x1a8] sm:$0xff] %v836
    %901 = vst [vmem:[#allocation2 + $0x1b0] sm:$0xff] %v837
    %902 = vst [vmem:[#allocation2 + $0x1b8] sm:$0xff] %v838
    %903 = vst [vmem:[#allocation2 + $0x1c0] sm:$0xff] %v839
    %904 = vst [vmem:[#allocation2 + $0x1c8] sm:$0xff] %v840
    %905 = vst [vmem:[#allocation2 + $0x1d0] sm:$0xff] %v841
    %906 = vst [vmem:[#allocation2 + $0x1d8] sm:$0xff] %v842
    %907 = vst [vmem:[#allocation2 + $0x1e0] sm:$0xff] %v843
    %908 = vst [vmem:[#allocation2 + $0x1e8] sm:$0xff] %v844
    %909 = vst [vmem:[#allocation2 + $0x1f0] sm:$0xff] %v845
    %910 = vst [vmem:[#allocation2 + $0x1f8] sm:$0xff] %v846
    // Predicated region
    $region26: #{tpu_custom_call.1} parent=1 // pred_check
      %p911 = pneg %p33
    $region27: #{tpu_custom_call.1} parent=1 // pred_check_branch
      %913 = sbr.rel (%p911) target = $region29
    $region28: #{tpu_custom_call.1} parent=1 // pred_region
      %v914 = vld [vmem:[#allocation2] sm:$0xff]
      %v915 = vld [vmem:[#allocation2 + $0x8] sm:$0xff]
      %v916 = vld [vmem:[#allocation2 + $0x10] sm:$0xff]
      %v917 = vld [vmem:[#allocation2 + $0x18] sm:$0xff]
      %v918 = vld [vmem:[#allocation2 + $0x20] sm:$0xff]
      %v919 = vld [vmem:[#allocation2 + $0x28] sm:$0xff]
      %v920 = vld [vmem:[#allocation2 + $0x30] sm:$0xff]
      %v921 = vld [vmem:[#allocation2 + $0x38] sm:$0xff]
      %v922 = vld [vmem:[#allocation2 + $0x40] sm:$0xff]
      %v923 = vld [vmem:[#allocation2 + $0x48] sm:$0xff]
      %v924 = vld [vmem:[#allocation2 + $0x50] sm:$0xff]
      %v925 = vld [vmem:[#allocation2 + $0x58] sm:$0xff]
      %v926 = vld [vmem:[#allocation2 + $0x60] sm:$0xff]
      %v927 = vld [vmem:[#allocation2 + $0x68] sm:$0xff]
      %v928 = vld [vmem:[#allocation2 + $0x70] sm:$0xff]
      %v929 = vld [vmem:[#allocation2 + $0x78] sm:$0xff]
      %v930 = vld [vmem:[#allocation2 + $0x80] sm:$0xff]
      %v931 = vld [vmem:[#allocation2 + $0x88] sm:$0xff]
      %v932 = vld [vmem:[#allocation2 + $0x90] sm:$0xff]
      %v933 = vld [vmem:[#allocation2 + $0x98] sm:$0xff]
      %v934 = vld [vmem:[#allocation2 + $0xa0] sm:$0xff]
      %v935 = vld [vmem:[#allocation2 + $0xa8] sm:$0xff]
      %v936 = vld [vmem:[#allocation2 + $0xb0] sm:$0xff]
      %v937 = vld [vmem:[#allocation2 + $0xb8] sm:$0xff]
      %v938 = vld [vmem:[#allocation2 + $0xc0] sm:$0xff]
      %v939 = vld [vmem:[#allocation2 + $0xc8] sm:$0xff]
      %v940 = vld [vmem:[#allocation2 + $0xd0] sm:$0xff]
      %v941 = vld [vmem:[#allocation2 + $0xd8] sm:$0xff]
      %v942 = vld [vmem:[#allocation2 + $0xe0] sm:$0xff]
      %v943 = vld [vmem:[#allocation2 + $0xe8] sm:$0xff]
      %v944 = vld [vmem:[#allocation2 + $0xf0] sm:$0xff]
      %v945 = vld [vmem:[#allocation2 + $0xf8] sm:$0xff]
      %v946 = vld [vmem:[#allocation2 + $0x100] sm:$0xff]
      %v947 = vld [vmem:[#allocation2 + $0x108] sm:$0xff]
      %v948 = vld [vmem:[#allocation2 + $0x110] sm:$0xff]
      %v949 = vld [vmem:[#allocation2 + $0x118] sm:$0xff]
      %v950 = vld [vmem:[#allocation2 + $0x120] sm:$0xff]
      %v951 = vld [vmem:[#allocation2 + $0x128] sm:$0xff]
      %v952 = vld [vmem:[#allocation2 + $0x130] sm:$0xff]
      %v953 = vld [vmem:[#allocation2 + $0x138] sm:$0xff]
      %v954 = vld [vmem:[#allocation2 + $0x140] sm:$0xff]
      %v955 = vld [vmem:[#allocation2 + $0x148] sm:$0xff]
      %v956 = vld [vmem:[#allocation2 + $0x150] sm:$0xff]
      %v957 = vld [vmem:[#allocation2 + $0x158] sm:$0xff]
      %v958 = vld [vmem:[#allocation2 + $0x160] sm:$0xff]
      %v959 = vld [vmem:[#allocation2 + $0x168] sm:$0xff]
      %v960 = vld [vmem:[#allocation2 + $0x170] sm:$0xff]
      %v961 = vld [vmem:[#allocation2 + $0x178] sm:$0xff]
      %v962 = vld [vmem:[#allocation2 + $0x180] sm:$0xff]
      %v963 = vld [vmem:[#allocation2 + $0x188] sm:$0xff]
      %v964 = vld [vmem:[#allocation2 + $0x190] sm:$0xff]
      %v965 = vld [vmem:[#allocation2 + $0x198] sm:$0xff]
      %v966 = vld [vmem:[#allocation2 + $0x1a0] sm:$0xff]
      %v967 = vld [vmem:[#allocation2 + $0x1a8] sm:$0xff]
      %v968 = vld [vmem:[#allocation2 + $0x1b0] sm:$0xff]
      %v969 = vld [vmem:[#allocation2 + $0x1b8] sm:$0xff]
      %v970 = vld [vmem:[#allocation2 + $0x1c0] sm:$0xff]
      %v971 = vld [vmem:[#allocation2 + $0x1c8] sm:$0xff]
      %v972 = vld [vmem:[#allocation2 + $0x1d0] sm:$0xff]
      %v973 = vld [vmem:[#allocation2 + $0x1d8] sm:$0xff]
      %v974 = vld [vmem:[#allocation2 + $0x1e0] sm:$0xff]
      %v975 = vld [vmem:[#allocation2 + $0x1e8] sm:$0xff]
      %v976 = vld [vmem:[#allocation2 + $0x1f0] sm:$0xff]
      %v977 = vld [vmem:[#allocation2 + $0x1f8] sm:$0xff]
      %v978 = vld [vmem:[%s2] sm:$0x1]
      %v980 = vlaneseq
      %v981 = vshrl.u32 %v980, 7
      %v982 = vsub.s32 0, %v981
      %v983 = vrot.slane %v978, %v982
      %v985 = vadd.f32 %v914, %v983
      %v986 = vadd.f32 %v915, %v983
      %v987 = vadd.f32 %v916, %v983
      %v988 = vadd.f32 %v917, %v983
      %v989 = vadd.f32 %v918, %v983
      %v990 = vadd.f32 %v919, %v983
      %v991 = vadd.f32 %v920, %v983
      %v992 = vadd.f32 %v921, %v983
      %v993 = vadd.f32 %v922, %v983
      %v994 = vadd.f32 %v923, %v983
      %v995 = vadd.f32 %v924, %v983
      %v996 = vadd.f32 %v925, %v983
      %v997 = vadd.f32 %v926, %v983
      %v998 = vadd.f32 %v927, %v983
      %v999 = vadd.f32 %v928, %v983
      %v1000 = vadd.f32 %v929, %v983
      %v1001 = vadd.f32 %v930, %v983
      %v1002 = vadd.f32 %v931, %v983
      %v1003 = vadd.f32 %v932, %v983
      %v1004 = vadd.f32 %v933, %v983
      %v1005 = vadd.f32 %v934, %v983
      %v1006 = vadd.f32 %v935, %v983
      %v1007 = vadd.f32 %v936, %v983
      %v1008 = vadd.f32 %v937, %v983
      %v1009 = vadd.f32 %v938, %v983
      %v1010 = vadd.f32 %v939, %v983
      %v1011 = vadd.f32 %v940, %v983
      %v1012 = vadd.f32 %v941, %v983
      %v1013 = vadd.f32 %v942, %v983
      %v1014 = vadd.f32 %v943, %v983
      %v1015 = vadd.f32 %v944, %v983
      %v1016 = vadd.f32 %v945, %v983
      %v1017 = vadd.f32 %v946, %v983
      %v1018 = vadd.f32 %v947, %v983
      %v1019 = vadd.f32 %v948, %v983
      %v1020 = vadd.f32 %v949, %v983
      %v1021 = vadd.f32 %v950, %v983
      %v1022 = vadd.f32 %v951, %v983
      %v1023 = vadd.f32 %v952, %v983
      %v1024 = vadd.f32 %v953, %v983
      %v1025 = vadd.f32 %v954, %v983
      %v1026 = vadd.f32 %v955, %v983
      %v1027 = vadd.f32 %v956, %v983
      %v1028 = vadd.f32 %v957, %v983
      %v1029 = vadd.f32 %v958, %v983
      %v1030 = vadd.f32 %v959, %v983
      %v1031 = vadd.f32 %v960, %v983
      %v1032 = vadd.f32 %v961, %v983
      %v1033 = vadd.f32 %v962, %v983
      %v1034 = vadd.f32 %v963, %v983
      %v1035 = vadd.f32 %v964, %v983
      %v1036 = vadd.f32 %v965, %v983
      %v1037 = vadd.f32 %v966, %v983
      %v1038 = vadd.f32 %v967, %v983
      %v1039 = vadd.f32 %v968, %v983
      %v1040 = vadd.f32 %v969, %v983
      %v1041 = vadd.f32 %v970, %v983
      %v1042 = vadd.f32 %v971, %v983
      %v1043 = vadd.f32 %v972, %v983
      %v1044 = vadd.f32 %v973, %v983
      %v1045 = vadd.f32 %v974, %v983
      %v1046 = vadd.f32 %v975, %v983
      %v1047 = vadd.f32 %v976, %v983
      %v1048 = vadd.f32 %v977, %v983
      %v1049 = vmul.f32 %v985, 1.4142135
      %v1050 = vmul.f32 %v986, 1.4142135
      %v1051 = vmul.f32 %v987, 1.4142135
      %v1052 = vmul.f32 %v988, 1.4142135
      %v1053 = vmul.f32 %v989, 1.4142135
      %v1054 = vmul.f32 %v990, 1.4142135
      %v1055 = vmul.f32 %v991, 1.4142135
      %v1056 = vmul.f32 %v992, 1.4142135
      %v1057 = vmul.f32 %v993, 1.4142135
      %v1058 = vmul.f32 %v994, 1.4142135
      %v1059 = vmul.f32 %v995, 1.4142135
      %v1060 = vmul.f32 %v996, 1.4142135
      %v1061 = vmul.f32 %v997, 1.4142135
      %v1062 = vmul.f32 %v998, 1.4142135
      %v1063 = vmul.f32 %v999, 1.4142135
      %v1064 = vmul.f32 %v1000, 1.4142135
      %v1065 = vmul.f32 %v1001, 1.4142135
      %v1066 = vmul.f32 %v1002, 1.4142135
      %v1067 = vmul.f32 %v1003, 1.4142135
      %v1068 = vmul.f32 %v1004, 1.4142135
      %v1069 = vmul.f32 %v1005, 1.4142135
      %v1070 = vmul.f32 %v1006, 1.4142135
      %v1071 = vmul.f32 %v1007, 1.4142135
      %v1072 = vmul.f32 %v1008, 1.4142135
      %v1073 = vmul.f32 %v1009, 1.4142135
      %v1074 = vmul.f32 %v1010, 1.4142135
      %v1075 = vmul.f32 %v1011, 1.4142135
      %v1076 = vmul.f32 %v1012, 1.4142135
      %v1077 = vmul.f32 %v1013, 1.4142135
      %v1078 = vmul.f32 %v1014, 1.4142135
      %v1079 = vmul.f32 %v1015, 1.4142135
      %v1080 = vmul.f32 %v1016, 1.4142135
      %v1081 = vmul.f32 %v1017, 1.4142135
      %v1082 = vmul.f32 %v1018, 1.4142135
      %v1083 = vmul.f32 %v1019, 1.4142135
      %v1084 = vmul.f32 %v1020, 1.4142135
      %v1085 = vmul.f32 %v1021, 1.4142135
      %v1086 = vmul.f32 %v1022, 1.4142135
      %v1087 = vmul.f32 %v1023, 1.4142135
      %v1088 = vmul.f32 %v1024, 1.4142135
      %v1089 = vmul.f32 %v1025, 1.4142135
      %v1090 = vmul.f32 %v1026, 1.4142135
      %v1091 = vmul.f32 %v1027, 1.4142135
      %v1092 = vmul.f32 %v1028, 1.4142135
      %v1093 = vmul.f32 %v1029, 1.4142135
      %v1094 = vmul.f32 %v1030, 1.4142135
      %v1095 = vmul.f32 %v1031, 1.4142135
      %v1096 = vmul.f32 %v1032, 1.4142135
      %v1097 = vmul.f32 %v1033, 1.4142135
      %v1098 = vmul.f32 %v1034, 1.4142135
      %v1099 = vmul.f32 %v1035, 1.4142135
      %v1100 = vmul.f32 %v1036, 1.4142135
      %v1101 = vmul.f32 %v1037, 1.4142135
      %v1102 = vmul.f32 %v1038, 1.4142135
      %v1103 = vmul.f32 %v1039, 1.4142135
      %v1104 = vmul.f32 %v1040, 1.4142135
      %v1105 = vmul.f32 %v1041, 1.4142135
      %v1106 = vmul.f32 %v1042, 1.4142135
      %v1107 = vmul.f32 %v1043, 1.4142135
      %v1108 = vmul.f32 %v1044, 1.4142135
      %v1109 = vmul.f32 %v1045, 1.4142135
      %v1110 = vmul.f32 %v1046, 1.4142135
      %v1111 = vmul.f32 %v1047, 1.4142135
      %v1112 = vmul.f32 %v1048, 1.4142135
      %vm1113 = vcmp.gt.f32.partialorder %v1049, 0.0
      %vm1114 = vcmp.gt.f32.partialorder %v1050, 0.0
      %vm1115 = vcmp.gt.f32.partialorder %v1051, 0.0
      %vm1116 = vcmp.gt.f32.partialorder %v1052, 0.0
      %vm1117 = vcmp.gt.f32.partialorder %v1053, 0.0
      %vm1118 = vcmp.gt.f32.partialorder %v1054, 0.0
      %vm1119 = vcmp.gt.f32.partialorder %v1055, 0.0
      %vm1120 = vcmp.gt.f32.partialorder %v1056, 0.0
      %vm1121 = vcmp.gt.f32.partialorder %v1057, 0.0
      %vm1122 = vcmp.gt.f32.partialorder %v1058, 0.0
      %vm1123 = vcmp.gt.f32.partialorder %v1059, 0.0
      %vm1124 = vcmp.gt.f32.partialorder %v1060, 0.0
      %vm1125 = vcmp.gt.f32.partialorder %v1061, 0.0
      %vm1126 = vcmp.gt.f32.partialorder %v1062, 0.0
      %vm1127 = vcmp.gt.f32.partialorder %v1063, 0.0
      %vm1128 = vcmp.gt.f32.partialorder %v1064, 0.0
      %vm1129 = vcmp.gt.f32.partialorder %v1065, 0.0
      %vm1130 = vcmp.gt.f32.partialorder %v1066, 0.0
      %vm1131 = vcmp.gt.f32.partialorder %v1067, 0.0
      %vm1132 = vcmp.gt.f32.partialorder %v1068, 0.0
      %vm1133 = vcmp.gt.f32.partialorder %v1069, 0.0
      %vm1134 = vcmp.gt.f32.partialorder %v1070, 0.0
      %vm1135 = vcmp.gt.f32.partialorder %v1071, 0.0
      %vm1136 = vcmp.gt.f32.partialorder %v1072, 0.0
      %vm1137 = vcmp.gt.f32.partialorder %v1073, 0.0
      %vm1138 = vcmp.gt.f32.partialorder %v1074, 0.0
      %vm1139 = vcmp.gt.f32.partialorder %v1075, 0.0
      %vm1140 = vcmp.gt.f32.partialorder %v1076, 0.0
      %vm1141 = vcmp.gt.f32.partialorder %v1077, 0.0
      %vm1142 = vcmp.gt.f32.partialorder %v1078, 0.0
      %vm1143 = vcmp.gt.f32.partialorder %v1079, 0.0
      %vm1144 = vcmp.gt.f32.partialorder %v1080, 0.0
      %vm1145 = vcmp.gt.f32.partialorder %v1081, 0.0
      %vm1146 = vcmp.gt.f32.partialorder %v1082, 0.0
      %vm1147 = vcmp.gt.f32.partialorder %v1083, 0.0
      %vm1148 = vcmp.gt.f32.partialorder %v1084, 0.0
      %vm1149 = vcmp.gt.f32.partialorder %v1085, 0.0
      %vm1150 = vcmp.gt.f32.partialorder %v1086, 0.0
      %vm1151 = vcmp.gt.f32.partialorder %v1087, 0.0
      %vm1152 = vcmp.gt.f32.partialorder %v1088, 0.0
      %vm1153 = vcmp.gt.f32.partialorder %v1089, 0.0
      %vm1154 = vcmp.gt.f32.partialorder %v1090, 0.0
      %vm1155 = vcmp.gt.f32.partialorder %v1091, 0.0
      %vm1156 = vcmp.gt.f32.partialorder %v1092, 0.0
      %vm1157 = vcmp.gt.f32.partialorder %v1093, 0.0
      %vm1158 = vcmp.gt.f32.partialorder %v1094, 0.0
      %vm1159 = vcmp.gt.f32.partialorder %v1095, 0.0
      %vm1160 = vcmp.gt.f32.partialorder %v1096, 0.0
      %vm1161 = vcmp.gt.f32.partialorder %v1097, 0.0
      %vm1162 = vcmp.gt.f32.partialorder %v1098, 0.0
      %vm1163 = vcmp.gt.f32.partialorder %v1099, 0.0
      %vm1164 = vcmp.gt.f32.partialorder %v1100, 0.0
      %vm1165 = vcmp.gt.f32.partialorder %v1101, 0.0
      %vm1166 = vcmp.gt.f32.partialorder %v1102, 0.0
      %vm1167 = vcmp.gt.f32.partialorder %v1103, 0.0
      %vm1168 = vcmp.gt.f32.partialorder %v1104, 0.0
      %vm1169 = vcmp.gt.f32.partialorder %v1105, 0.0
      %vm1170 = vcmp.gt.f32.partialorder %v1106, 0.0
      %vm1171 = vcmp.gt.f32.partialorder %v1107, 0.0
      %vm1172 = vcmp.gt.f32.partialorder %v1108, 0.0
      %vm1173 = vcmp.gt.f32.partialorder %v1109, 0.0
      %vm1174 = vcmp.gt.f32.partialorder %v1110, 0.0
      %vm1175 = vcmp.gt.f32.partialorder %v1111, 0.0
      %vm1176 = vcmp.gt.f32.partialorder %v1112, 0.0
      %v1177 = vmul.f32 %v1049, 0.2
      %v1178 = vmul.f32 %v1050, 0.2
      %v1179 = vmul.f32 %v1051, 0.2
      %v1180 = vmul.f32 %v1052, 0.2
      %v1181 = vmul.f32 %v1053, 0.2
      %v1182 = vmul.f32 %v1054, 0.2
      %v1183 = vmul.f32 %v1055, 0.2
      %v1184 = vmul.f32 %v1056, 0.2
      %v1185 = vmul.f32 %v1057, 0.2
      %v1186 = vmul.f32 %v1058, 0.2
      %v1187 = vmul.f32 %v1059, 0.2
      %v1188 = vmul.f32 %v1060, 0.2
      %v1189 = vmul.f32 %v1061, 0.2
      %v1190 = vmul.f32 %v1062, 0.2
      %v1191 = vmul.f32 %v1063, 0.2
      %v1192 = vmul.f32 %v1064, 0.2
      %v1193 = vmul.f32 %v1065, 0.2
      %v1194 = vmul.f32 %v1066, 0.2
      %v1195 = vmul.f32 %v1067, 0.2
      %v1196 = vmul.f32 %v1068, 0.2
      %v1197 = vmul.f32 %v1069, 0.2
      %v1198 = vmul.f32 %v1070, 0.2
      %v1199 = vmul.f32 %v1071, 0.2
      %v1200 = vmul.f32 %v1072, 0.2
      %v1201 = vmul.f32 %v1073, 0.2
      %v1202 = vmul.f32 %v1074, 0.2
      %v1203 = vmul.f32 %v1075, 0.2
      %v1204 = vmul.f32 %v1076, 0.2
      %v1205 = vmul.f32 %v1077, 0.2
      %v1206 = vmul.f32 %v1078, 0.2
      %v1207 = vmul.f32 %v1079, 0.2
      %v1208 = vmul.f32 %v1080, 0.2
      %v1209 = vmul.f32 %v1081, 0.2
      %v1210 = vmul.f32 %v1082, 0.2
      %v1211 = vmul.f32 %v1083, 0.2
      %v1212 = vmul.f32 %v1084, 0.2
      %v1213 = vmul.f32 %v1085, 0.2
      %v1214 = vmul.f32 %v1086, 0.2
      %v1215 = vmul.f32 %v1087, 0.2
      %v1216 = vmul.f32 %v1088, 0.2
      %v1217 = vmul.f32 %v1089, 0.2
      %v1218 = vmul.f32 %v1090, 0.2
      %v1219 = vmul.f32 %v1091, 0.2
      %v1220 = vmul.f32 %v1092, 0.2
      %v1221 = vmul.f32 %v1093, 0.2
      %v1222 = vmul.f32 %v1094, 0.2
      %v1223 = vmul.f32 %v1095, 0.2
      %v1224 = vmul.f32 %v1096, 0.2
      %v1225 = vmul.f32 %v1097, 0.2
      %v1226 = vmul.f32 %v1098, 0.2
      %v1227 = vmul.f32 %v1099, 0.2
      %v1228 = vmul.f32 %v1100, 0.2
      %v1229 = vmul.f32 %v1101, 0.2
      %v1230 = vmul.f32 %v1102, 0.2
      %v1231 = vmul.f32 %v1103, 0.2
      %v1232 = vmul.f32 %v1104, 0.2
      %v1233 = vmul.f32 %v1105, 0.2
      %v1234 = vmul.f32 %v1106, 0.2
      %v1235 = vmul.f32 %v1107, 0.2
      %v1236 = vmul.f32 %v1108, 0.2
      %v1237 = vmul.f32 %v1109, 0.2
      %v1238 = vmul.f32 %v1110, 0.2
      %v1239 = vmul.f32 %v1111, 0.2
      %v1240 = vmul.f32 %v1112, 0.2
      %v1241 = vsel %vm1113, %v1049, %v1177
      %v1242 = vsel %vm1114, %v1050, %v1178
      %v1243 = vsel %vm1115, %v1051, %v1179
      %v1244 = vsel %vm1116, %v1052, %v1180
      %v1245 = vsel %vm1117, %v1053, %v1181
      %v1246 = vsel %vm1118, %v1054, %v1182
      %v1247 = vsel %vm1119, %v1055, %v1183
      %v1248 = vsel %vm1120, %v1056, %v1184
      %v1249 = vsel %vm1121, %v1057, %v1185
      %v1250 = vsel %vm1122, %v1058, %v1186
      %v1251 = vsel %vm1123, %v1059, %v1187
      %v1252 = vsel %vm1124, %v1060, %v1188
      %v1253 = vsel %vm1125, %v1061, %v1189
      %v1254 = vsel %vm1126, %v1062, %v1190
      %v1255 = vsel %vm1127, %v1063, %v1191
      %v1256 = vsel %vm1128, %v1064, %v1192
      %v1257 = vsel %vm1129, %v1065, %v1193
      %v1258 = vsel %vm1130, %v1066, %v1194
      %v1259 = vsel %vm1131, %v1067, %v1195
      %v1260 = vsel %vm1132, %v1068, %v1196
      %v1261 = vsel %vm1133, %v1069, %v1197
      %v1262 = vsel %vm1134, %v1070, %v1198
      %v1263 = vsel %vm1135, %v1071, %v1199
      %v1264 = vsel %vm1136, %v1072, %v1200
      %v1265 = vsel %vm1137, %v1073, %v1201
      %v1266 = vsel %vm1138, %v1074, %v1202
      %v1267 = vsel %vm1139, %v1075, %v1203
      %v1268 = vsel %vm1140, %v1076, %v1204
      %v1269 = vsel %vm1141, %v1077, %v1205
      %v1270 = vsel %vm1142, %v1078, %v1206
      %v1271 = vsel %vm1143, %v1079, %v1207
      %v1272 = vsel %vm1144, %v1080, %v1208
      %v1273 = vsel %vm1145, %v1081, %v1209
      %v1274 = vsel %vm1146, %v1082, %v1210
      %v1275 = vsel %vm1147, %v1083, %v1211
      %v1276 = vsel %vm1148, %v1084, %v1212
      %v1277 = vsel %vm1149, %v1085, %v1213
      %v1278 = vsel %vm1150, %v1086, %v1214
      %v1279 = vsel %vm1151, %v1087, %v1215
      %v1280 = vsel %vm1152, %v1088, %v1216
      %v1281 = vsel %vm1153, %v1089, %v1217
      %v1282 = vsel %vm1154, %v1090, %v1218
      %v1283 = vsel %vm1155, %v1091, %v1219
      %v1284 = vsel %vm1156, %v1092, %v1220
      %v1285 = vsel %vm1157, %v1093, %v1221
      %v1286 = vsel %vm1158, %v1094, %v1222
      %v1287 = vsel %vm1159, %v1095, %v1223
      %v1288 = vsel %vm1160, %v1096, %v1224
      %v1289 = vsel %vm1161, %v1097, %v1225
      %v1290 = vsel %vm1162, %v1098, %v1226
      %v1291 = vsel %vm1163, %v1099, %v1227
      %v1292 = vsel %vm1164, %v1100, %v1228
      %v1293 = vsel %vm1165, %v1101, %v1229
      %v1294 = vsel %vm1166, %v1102, %v1230
      %v1295 = vsel %vm1167, %v1103, %v1231
      %v1296 = vsel %vm1168, %v1104, %v1232
      %v1297 = vsel %vm1169, %v1105, %v1233
      %v1298 = vsel %vm1170, %v1106, %v1234
      %v1299 = vsel %vm1171, %v1107, %v1235
      %v1300 = vsel %vm1172, %v1108, %v1236
      %v1301 = vsel %vm1173, %v1109, %v1237
      %v1302 = vsel %vm1174, %v1110, %v1238
      %v1303 = vsel %vm1175, %v1111, %v1239
      %v1304 = vsel %vm1176, %v1112, %v1240
      %v1305 = vld [vmem:[#allocation3] sm:$0xff]
      %v1306 = vld [vmem:[#allocation3 + $0x8] sm:$0xff]
      %v1307 = vld [vmem:[#allocation3 + $0x10] sm:$0xff]
      %v1308 = vld [vmem:[#allocation3 + $0x18] sm:$0xff]
      %v1309 = vld [vmem:[#allocation3 + $0x20] sm:$0xff]
      %v1310 = vld [vmem:[#allocation3 + $0x28] sm:$0xff]
      %v1311 = vld [vmem:[#allocation3 + $0x30] sm:$0xff]
      %v1312 = vld [vmem:[#allocation3 + $0x38] sm:$0xff]
      %v1313 = vld [vmem:[#allocation3 + $0x40] sm:$0xff]
      %v1314 = vld [vmem:[#allocation3 + $0x48] sm:$0xff]
      %v1315 = vld [vmem:[#allocation3 + $0x50] sm:$0xff]
      %v1316 = vld [vmem:[#allocation3 + $0x58] sm:$0xff]
      %v1317 = vld [vmem:[#allocation3 + $0x60] sm:$0xff]
      %v1318 = vld [vmem:[#allocation3 + $0x68] sm:$0xff]
      %v1319 = vld [vmem:[#allocation3 + $0x70] sm:$0xff]
      %v1320 = vld [vmem:[#allocation3 + $0x78] sm:$0xff]
      %v1321 = vld [vmem:[#allocation3 + $0x80] sm:$0xff]
      %v1322 = vld [vmem:[#allocation3 + $0x88] sm:$0xff]
      %v1323 = vld [vmem:[#allocation3 + $0x90] sm:$0xff]
      %v1324 = vld [vmem:[#allocation3 + $0x98] sm:$0xff]
      %v1325 = vld [vmem:[#allocation3 + $0xa0] sm:$0xff]
      %v1326 = vld [vmem:[#allocation3 + $0xa8] sm:$0xff]
      %v1327 = vld [vmem:[#allocation3 + $0xb0] sm:$0xff]
      %v1328 = vld [vmem:[#allocation3 + $0xb8] sm:$0xff]
      %v1329 = vld [vmem:[#allocation3 + $0xc0] sm:$0xff]
      %v1330 = vld [vmem:[#allocation3 + $0xc8] sm:$0xff]
      %v1331 = vld [vmem:[#allocation3 + $0xd0] sm:$0xff]
      %v1332 = vld [vmem:[#allocation3 + $0xd8] sm:$0xff]
      %v1333 = vld [vmem:[#allocation3 + $0xe0] sm:$0xff]
      %v1334 = vld [vmem:[#allocation3 + $0xe8] sm:$0xff]
      %v1335 = vld [vmem:[#allocation3 + $0xf0] sm:$0xff]
      %v1336 = vld [vmem:[#allocation3 + $0xf8] sm:$0xff]
      %v1337 = vld [vmem:[#allocation3 + $0x100] sm:$0xff]
      %v1338 = vld [vmem:[#allocation3 + $0x108] sm:$0xff]
      %v1339 = vld [vmem:[#allocation3 + $0x110] sm:$0xff]
      %v1340 = vld [vmem:[#allocation3 + $0x118] sm:$0xff]
      %v1341 = vld [vmem:[#allocation3 + $0x120] sm:$0xff]
      %v1342 = vld [vmem:[#allocation3 + $0x128] sm:$0xff]
      %v1343 = vld [vmem:[#allocation3 + $0x130] sm:$0xff]
      %v1344 = vld [vmem:[#allocation3 + $0x138] sm:$0xff]
      %v1345 = vld [vmem:[#allocation3 + $0x140] sm:$0xff]
      %v1346 = vld [vmem:[#allocation3 + $0x148] sm:$0xff]
      %v1347 = vld [vmem:[#allocation3 + $0x150] sm:$0xff]
      %v1348 = vld [vmem:[#allocation3 + $0x158] sm:$0xff]
      %v1349 = vld [vmem:[#allocation3 + $0x160] sm:$0xff]
      %v1350 = vld [vmem:[#allocation3 + $0x168] sm:$0xff]
      %v1351 = vld [vmem:[#allocation3 + $0x170] sm:$0xff]
      %v1352 = vld [vmem:[#allocation3 + $0x178] sm:$0xff]
      %v1353 = vld [vmem:[#allocation3 + $0x180] sm:$0xff]
      %v1354 = vld [vmem:[#allocation3 + $0x188] sm:$0xff]
      %v1355 = vld [vmem:[#allocation3 + $0x190] sm:$0xff]
      %v1356 = vld [vmem:[#allocation3 + $0x198] sm:$0xff]
      %v1357 = vld [vmem:[#allocation3 + $0x1a0] sm:$0xff]
      %v1358 = vld [vmem:[#allocation3 + $0x1a8] sm:$0xff]
      %v1359 = vld [vmem:[#allocation3 + $0x1b0] sm:$0xff]
      %v1360 = vld [vmem:[#allocation3 + $0x1b8] sm:$0xff]
      %v1361 = vld [vmem:[#allocation3 + $0x1c0] sm:$0xff]
      %v1362 = vld [vmem:[#allocation3 + $0x1c8] sm:$0xff]
      %v1363 = vld [vmem:[#allocation3 + $0x1d0] sm:$0xff]
      %v1364 = vld [vmem:[#allocation3 + $0x1d8] sm:$0xff]
      %v1365 = vld [vmem:[#allocation3 + $0x1e0] sm:$0xff]
      %v1366 = vld [vmem:[#allocation3 + $0x1e8] sm:$0xff]
      %v1367 = vld [vmem:[#allocation3 + $0x1f0] sm:$0xff]
      %v1368 = vld [vmem:[#allocation3 + $0x1f8] sm:$0xff]
      %v1369 = vadd.f32 %v1241, %v1305
      %v1370 = vadd.f32 %v1242, %v1306
      %v1371 = vadd.f32 %v1243, %v1307
      %v1372 = vadd.f32 %v1244, %v1308
      %v1373 = vadd.f32 %v1245, %v1309
      %v1374 = vadd.f32 %v1246, %v1310
      %v1375 = vadd.f32 %v1247, %v1311
      %v1376 = vadd.f32 %v1248, %v1312
      %v1377 = vadd.f32 %v1249, %v1313
      %v1378 = vadd.f32 %v1250, %v1314
      %v1379 = vadd.f32 %v1251, %v1315
      %v1380 = vadd.f32 %v1252, %v1316
      %v1381 = vadd.f32 %v1253, %v1317
      %v1382 = vadd.f32 %v1254, %v1318
      %v1383 = vadd.f32 %v1255, %v1319
      %v1384 = vadd.f32 %v1256, %v1320
      %v1385 = vadd.f32 %v1257, %v1321
      %v1386 = vadd.f32 %v1258, %v1322
      %v1387 = vadd.f32 %v1259, %v1323
      %v1388 = vadd.f32 %v1260, %v1324
      %v1389 = vadd.f32 %v1261, %v1325
      %v1390 = vadd.f32 %v1262, %v1326
      %v1391 = vadd.f32 %v1263, %v1327
      %v1392 = vadd.f32 %v1264, %v1328
      %v1393 = vadd.f32 %v1265, %v1329
      %v1394 = vadd.f32 %v1266, %v1330
      %v1395 = vadd.f32 %v1267, %v1331
      %v1396 = vadd.f32 %v1268, %v1332
      %v1397 = vadd.f32 %v1269, %v1333
      %v1398 = vadd.f32 %v1270, %v1334
      %v1399 = vadd.f32 %v1271, %v1335
      %v1400 = vadd.f32 %v1272, %v1336
      %v1401 = vadd.f32 %v1273, %v1337
      %v1402 = vadd.f32 %v1274, %v1338
      %v1403 = vadd.f32 %v1275, %v1339
      %v1404 = vadd.f32 %v1276, %v1340
      %v1405 = vadd.f32 %v1277, %v1341
      %v1406 = vadd.f32 %v1278, %v1342
      %v1407 = vadd.f32 %v1279, %v1343
      %v1408 = vadd.f32 %v1280, %v1344
      %v1409 = vadd.f32 %v1281, %v1345
      %v1410 = vadd.f32 %v1282, %v1346
      %v1411 = vadd.f32 %v1283, %v1347
      %v1412 = vadd.f32 %v1284, %v1348
      %v1413 = vadd.f32 %v1285, %v1349
      %v1414 = vadd.f32 %v1286, %v1350
      %v1415 = vadd.f32 %v1287, %v1351
      %v1416 = vadd.f32 %v1288, %v1352
      %v1417 = vadd.f32 %v1289, %v1353
      %v1418 = vadd.f32 %v1290, %v1354
      %v1419 = vadd.f32 %v1291, %v1355
      %v1420 = vadd.f32 %v1292, %v1356
      %v1421 = vadd.f32 %v1293, %v1357
      %v1422 = vadd.f32 %v1294, %v1358
      %v1423 = vadd.f32 %v1295, %v1359
      %v1424 = vadd.f32 %v1296, %v1360
      %v1425 = vadd.f32 %v1297, %v1361
      %v1426 = vadd.f32 %v1298, %v1362
      %v1427 = vadd.f32 %v1299, %v1363
      %v1428 = vadd.f32 %v1300, %v1364
      %v1429 = vadd.f32 %v1301, %v1365
      %v1430 = vadd.f32 %v1302, %v1366
      %v1431 = vadd.f32 %v1303, %v1367
      %v1432 = vadd.f32 %v1304, %v1368
      %1433 = vst [vmem:[#allocation6] sm:$0xff] %v1369
      %1434 = vst [vmem:[#allocation6 + $0x8] sm:$0xff] %v1370
      %1435 = vst [vmem:[#allocation6 + $0x10] sm:$0xff] %v1371
      %1436 = vst [vmem:[#allocation6 + $0x18] sm:$0xff] %v1372
      %1437 = vst [vmem:[#allocation6 + $0x20] sm:$0xff] %v1373
      %1438 = vst [vmem:[#allocation6 + $0x28] sm:$0xff] %v1374
      %1439 = vst [vmem:[#allocation6 + $0x30] sm:$0xff] %v1375
      %1440 = vst [vmem:[#allocation6 + $0x38] sm:$0xff] %v1376
      %1441 = vst [vmem:[#allocation6 + $0x40] sm:$0xff] %v1377
      %1442 = vst [vmem:[#allocation6 + $0x48] sm:$0xff] %v1378
      %1443 = vst [vmem:[#allocation6 + $0x50] sm:$0xff] %v1379
      %1444 = vst [vmem:[#allocation6 + $0x58] sm:$0xff] %v1380
      %1445 = vst [vmem:[#allocation6 + $0x60] sm:$0xff] %v1381
      %1446 = vst [vmem:[#allocation6 + $0x68] sm:$0xff] %v1382
      %1447 = vst [vmem:[#allocation6 + $0x70] sm:$0xff] %v1383
      %1448 = vst [vmem:[#allocation6 + $0x78] sm:$0xff] %v1384
      %1449 = vst [vmem:[#allocation6 + $0x80] sm:$0xff] %v1385
      %1450 = vst [vmem:[#allocation6 + $0x88] sm:$0xff] %v1386
      %1451 = vst [vmem:[#allocation6 + $0x90] sm:$0xff] %v1387
      %1452 = vst [vmem:[#allocation6 + $0x98] sm:$0xff] %v1388
      %1453 = vst [vmem:[#allocation6 + $0xa0] sm:$0xff] %v1389
      %1454 = vst [vmem:[#allocation6 + $0xa8] sm:$0xff] %v1390
      %1455 = vst [vmem:[#allocation6 + $0xb0] sm:$0xff] %v1391
      %1456 = vst [vmem:[#allocation6 + $0xb8] sm:$0xff] %v1392
      %1457 = vst [vmem:[#allocation6 + $0xc0] sm:$0xff] %v1393
      %1458 = vst [vmem:[#allocation6 + $0xc8] sm:$0xff] %v1394
      %1459 = vst [vmem:[#allocation6 + $0xd0] sm:$0xff] %v1395
      %1460 = vst [vmem:[#allocation6 + $0xd8] sm:$0xff] %v1396
      %1461 = vst [vmem:[#allocation6 + $0xe0] sm:$0xff] %v1397
      %1462 = vst [vmem:[#allocation6 + $0xe8] sm:$0xff] %v1398
      %1463 = vst [vmem:[#allocation6 + $0xf0] sm:$0xff] %v1399
      %1464 = vst [vmem:[#allocation6 + $0xf8] sm:$0xff] %v1400
      %1465 = vst [vmem:[#allocation6 + $0x100] sm:$0xff] %v1401
      %1466 = vst [vmem:[#allocation6 + $0x108] sm:$0xff] %v1402
      %1467 = vst [vmem:[#allocation6 + $0x110] sm:$0xff] %v1403
      %1468 = vst [vmem:[#allocation6 + $0x118] sm:$0xff] %v1404
      %1469 = vst [vmem:[#allocation6 + $0x120] sm:$0xff] %v1405
      %1470 = vst [vmem:[#allocation6 + $0x128] sm:$0xff] %v1406
      %1471 = vst [vmem:[#allocation6 + $0x130] sm:$0xff] %v1407
      %1472 = vst [vmem:[#allocation6 + $0x138] sm:$0xff] %v1408
      %1473 = vst [vmem:[#allocation6 + $0x140] sm:$0xff] %v1409
      %1474 = vst [vmem:[#allocation6 + $0x148] sm:$0xff] %v1410
      %1475 = vst [vmem:[#allocation6 + $0x150] sm:$0xff] %v1411
      %1476 = vst [vmem:[#allocation6 + $0x158] sm:$0xff] %v1412
      %1477 = vst [vmem:[#allocation6 + $0x160] sm:$0xff] %v1413
      %1478 = vst [vmem:[#allocation6 + $0x168] sm:$0xff] %v1414
      %1479 = vst [vmem:[#allocation6 + $0x170] sm:$0xff] %v1415
      %1480 = vst [vmem:[#allocation6 + $0x178] sm:$0xff] %v1416
      %1481 = vst [vmem:[#allocation6 + $0x180] sm:$0xff] %v1417
      %1482 = vst [vmem:[#allocation6 + $0x188] sm:$0xff] %v1418
      %1483 = vst [vmem:[#allocation6 + $0x190] sm:$0xff] %v1419
      %1484 = vst [vmem:[#allocation6 + $0x198] sm:$0xff] %v1420
      %1485 = vst [vmem:[#allocation6 + $0x1a0] sm:$0xff] %v1421
      %1486 = vst [vmem:[#allocation6 + $0x1a8] sm:$0xff] %v1422
      %1487 = vst [vmem:[#allocation6 + $0x1b0] sm:$0xff] %v1423
      %1488 = vst [vmem:[#allocation6 + $0x1b8] sm:$0xff] %v1424
      %1489 = vst [vmem:[#allocation6 + $0x1c0] sm:$0xff] %v1425
      %1490 = vst [vmem:[#allocation6 + $0x1c8] sm:$0xff] %v1426
      %1491 = vst [vmem:[#allocation6 + $0x1d0] sm:$0xff] %v1427
      %1492 = vst [vmem:[#allocation6 + $0x1d8] sm:$0xff] %v1428
      %1493 = vst [vmem:[#allocation6 + $0x1e0] sm:$0xff] %v1429
      %1494 = vst [vmem:[#allocation6 + $0x1e8] sm:$0xff] %v1430
      %1495 = vst [vmem:[#allocation6 + $0x1f0] sm:$0xff] %v1431
      %1496 = vst [vmem:[#allocation6 + $0x1f8] sm:$0xff] %v1432
    $region29: #{tpu_custom_call.1} parent=1 // pred_fallthru
      _
    // Predicated region
    $region30: #{tpu_custom_call.1} parent=1 // pred_check
      _
    $region31: #{tpu_custom_call.1} parent=1 // pred_check_branch
      %1498 = sbr.rel (0) target = $region33
    $region32: #{tpu_custom_call.1} parent=1 // pred_region
      %s1500 = ssub.s32 8192, 8192
      %1501 = vsyncadd [#allocation5], %s1500
      %s1502 = sshll.u32 [#allocation6], 4
      %s1503 = int_to_ptr.vmem [resolvable:$true] %s1502
      %1508 = dma.vmem_to_hbm [thread:$0]  %s1503, 8192, %s4, [#allocation5], 128, 128, 8
    $region33: #{tpu_custom_call.1} parent=1 // pred_fallthru
      _
    // Predicated region
    $region34: #{tpu_custom_call.1} parent=1 // pred_check
      _
    $region35: #{tpu_custom_call.1} parent=1 // pred_check_branch
      %1510 = sbr.rel (0) target = $region37
    $region36: #{tpu_custom_call.1} parent=1 // pred_region
      %1511 = dma.done [#allocation5], 8192
    $region37: #{tpu_custom_call.1} parent=1 // pred_fallthru
      _
    %1512 = vsyncpa [#allocation4], 1
    %1513 = vsyncpa [#allocation5], 1

</llo_original>
